<compile_context>
chip_gen: v6e
topology: v6e:2x2x1
jax: 0.10.0
libtpu: 0.0.40
codegen_flags: <defaults>
</compile_context>

<pallas_src>
import numpy as np
import jax
import jax.numpy as jnp
from jax.experimental import pallas as pl
from jax.experimental.pallas import tpu as pltpu

_VMEM_LIMIT = 32 * 1024 * 1024  # scoped-VMEM budget, safe on v5e/v6e/v7x


# -----------------------------------------------------------------------------
# Kernel 1: first BiLSTM (fused directions, fused sentences), per-timestep output
# -----------------------------------------------------------------------------
def bilstm1_kernel(x_ref, wih_ref, whhf_ref, whhb_ref, b_ref, out_ref, xw_ref):
    """x_ref:   (T*N, E)  bf16, time-major rows (row t*N+n = timestep t, batch n)
    wih_ref: (E, 8H)   bf16, [fwd (i,f,o,g) | bwd (i,f,o,g)] -> 128 lanes
    whhf_ref/whhb_ref: (H, 4H) bf16 per-direction hidden weights
    b_ref:   (1, 8H)   f32 combined bias (b_ih + b_hh) per direction
    out_ref: (T, N, 2H) bf16 bidirectional hidden states, natural time order
    xw_ref:  (T*N, 8H) f32 scratch -- hoisted input projection.
    """
    T, N, H2 = out_ref.shape
    H = H2 // 2
    G = 4 * H

    # ONE big projection matmul for both directions; bias folded in.
    xw_ref[...] = (jnp.dot(x_ref[...], wih_ref[...],
                           preferred_element_type=jnp.float32) + b_ref[...])

    whh_f = whhf_ref[...]
    whh_b = whhb_ref[...]

    # Carries live in vregs; static time indices (Python unroll).
    # TODO(synk): for large T switch to lax.fori_loop with a capped unroll and
    # per-step (or chunked) output stores to bound vreg pressure.
    h_f = jnp.zeros((N, H), jnp.float32); c_f = jnp.zeros((N, H), jnp.float32)
    h_b = jnp.zeros((N, H), jnp.float32); c_b = jnp.zeros((N, H), jnp.float32)
    hs_f, hs_b = [], []
    for s in range(T):
        tb = T - 1 - s
        hid_f = jnp.dot(h_f.astype(jnp.bfloat16), whh_f,
                        preferred_element_type=jnp.float32)
        hid_b = jnp.dot(h_b.astype(jnp.bfloat16), whh_b,
                        preferred_element_type=jnp.float32)
        g_f = xw_ref[s * N:(s + 1) * N, 0:G] + hid_f          # fwd @ time s
        g_b = xw_ref[tb * N:(tb + 1) * N, G:2 * G] + hid_b    # bwd @ time T-1-s
        sf = jax.nn.sigmoid(g_f[:, :3 * H]); gg_f = jnp.tanh(g_f[:, 3 * H:])
        sb = jax.nn.sigmoid(g_b[:, :3 * H]); gg_b = jnp.tanh(g_b[:, 3 * H:])
        c_f = sf[:, H:2 * H] * c_f + sf[:, :H] * gg_f
        c_b = sb[:, H:2 * H] * c_b + sb[:, :H] * gg_b
        h_f = sf[:, 2 * H:3 * H] * jnp.tanh(c_f)
        h_b = sb[:, 2 * H:3 * H] * jnp.tanh(c_b)
        hs_f.append(h_f)
        hs_b.append(h_b)

    # Single lane-dense writeback of the whole (T, N, 2H) slab.
    out_f = jnp.stack(hs_f, axis=0)            # time order
    out_b = jnp.stack(hs_b[::-1], axis=0)      # reverse processing -> time order
    out_ref[...] = jnp.concatenate([out_f, out_b], axis=-1).astype(out_ref.dtype)


# -----------------------------------------------------------------------------
# Kernel 2: soft attention alignment + ESIM feature concat (whole batch at once)
# -----------------------------------------------------------------------------
def attention_kernel(h_ref, m_ref):
    """h_ref: (T, N, D) bf16 time-major BiLSTM1 output, rows [:B]=sent1, [B:]=sent2
    m_ref: (T, N, 4D) bf16 = cat([x, x_align, x - x_align, x * x_align], -1),
           written time-major so the next kernel consumes it directly."""
    T, N, D = h_ref.shape
    B = N // 2
    hf = h_ref[...].astype(jnp.float32)                       # (T, N, D)

    rows1, rows2 = [], []
    for b in range(B):
        x1f = hf[:, b, :]                                     # (T, D) sentence 1
        x2f = hf[:, B + b, :]                                 # (T, D) sentence 2
        x1 = x1f.astype(jnp.bfloat16)
        x2 = x2f.astype(jnp.bfloat16)

        # att[t, s] = <x1[t], x2[s]>
        att = jax.lax.dot_general(x1, x2, (((1,), (1,)), ((), ())),
                                  preferred_element_type=jnp.float32)   # (T, T)
        w1 = jax.nn.softmax(att, axis=-1)
        x1a = jnp.dot(w1.astype(jnp.bfloat16), x2,
                      preferred_element_type=jnp.float32)               # (T, D)

        # Transposed attention as a second MXU dot (no XLU transpose).
        att2 = jax.lax.dot_general(x2, x1, (((1,), (1,)), ((), ())),
                                   preferred_element_type=jnp.float32)  # (T, T)
        w2 = jax.nn.softmax(att2, axis=-1)
        x2a = jnp.dot(w2.astype(jnp.bfloat16), x1,
                      preferred_element_type=jnp.float32)               # (T, D)

        rows1.append(jnp.concatenate([x1f, x1a, x1f - x1a, x1f * x1a], axis=-1))
        rows2.append(jnp.concatenate([x2f, x2a, x2f - x2a, x2f * x2a], axis=-1))

    m = jnp.stack(rows1 + rows2, axis=1)                      # (T, N, 4D)
    m_ref[...] = m.astype(m_ref.dtype)


# -----------------------------------------------------------------------------
# Kernel 3: second BiLSTM + avg/max pooling + classifier head (fused epilogue)
# -----------------------------------------------------------------------------
def bilstm2_pool_head_kernel(m_ref, wih_ref, whhf_ref, whhb_ref, b_ref,
                             wcls_ref, bcls_ref, out_ref, xw_ref):
    """m_ref:  (T*N, Din) bf16 time-major ESIM features
    wih_ref:  (Din, 8H) bf16; whhf/whhb: (H, 4H) bf16; b_ref: (1, 8H) f32
    wcls_ref: (8H, Cp) bf16 zero-padded cols; bcls_ref: (1, Cp) f32 (-1e30 pads)
    out_ref:  (B, Cp) f32 softmax probabilities
    xw_ref:   (T*N, 8H) f32 scratch.
    """
    B = out_ref.shape[0]
    N = 2 * B
    H = whhf_ref.shape[0]
    G = 4 * H
    T = m_ref.shape[0] // N

    # TODO(synk): for v7x-scale shapes store xw in bf16 (re-add f32 bias in-step)
    # and tile over T/N to respect the 64 MiB VMEM budget.
    xw_ref[...] = (jnp.dot(m_ref[...], wih_ref[...],
                           preferred_element_type=jnp.float32) + b_ref[...])

    whh_f = whhf_ref[...]
    whh_b = whhb_ref[...]

    h_f = jnp.zeros((N, H), jnp.float32); c_f = jnp.zeros((N, H), jnp.float32)
    h_b = jnp.zeros((N, H), jnp.float32); c_b = jnp.zeros((N, H), jnp.float32)
    sum_f = jnp.zeros((N, H), jnp.float32); sum_b = jnp.zeros((N, H), jnp.float32)
    mx_f = jnp.full((N, H), -jnp.inf, jnp.float32)
    mx_b = jnp.full((N, H), -jnp.inf, jnp.float32)

    for s in range(T):
        tb = T - 1 - s
        hid_f = jnp.dot(h_f.astype(jnp.bfloat16), whh_f,
                        preferred_element_type=jnp.float32)
        hid_b = jnp.dot(h_b.astype(jnp.bfloat16), whh_b,
                        preferred_element_type=jnp.float32)
        g_f = xw_ref[s * N:(s + 1) * N, 0:G] + hid_f
        g_b = xw_ref[tb * N:(tb + 1) * N, G:2 * G] + hid_b
        sf = jax.nn.sigmoid(g_f[:, :3 * H]); gg_f = jnp.tanh(g_f[:, 3 * H:])
        sb = jax.nn.sigmoid(g_b[:, :3 * H]); gg_b = jnp.tanh(g_b[:, 3 * H:])
        c_f = sf[:, H:2 * H] * c_f + sf[:, :H] * gg_f
        c_b = sb[:, H:2 * H] * c_b + sb[:, :H] * gg_b
        h_f = sf[:, 2 * H:3 * H] * jnp.tanh(c_f)
        h_b = sb[:, 2 * H:3 * H] * jnp.tanh(c_b)
        # Pooling is order-invariant over time: running sum/max in vregs.
        sum_f = sum_f + h_f
        sum_b = sum_b + h_b
        mx_f = jnp.maximum(mx_f, h_f)
        mx_b = jnp.maximum(mx_b, h_b)

    avg = jnp.concatenate([sum_f, sum_b], axis=-1) * (1.0 / T)        # (N, 2H)
    mxx = jnp.concatenate([mx_f, mx_b], axis=-1)                      # (N, 2H)
    # PyTorch order: [avg(out1), max(out1), avg(out2), max(out2)], each [fwd|bwd].
    feat = jnp.concatenate([avg[:B], mxx[:B], avg[B:], mxx[B:]], axis=-1)  # (B, 8H)

    logits = jnp.dot(feat.astype(jnp.bfloat16), wcls_ref[...],
                     preferred_element_type=jnp.float32) + bcls_ref[...]
    out_ref[...] = jax.nn.softmax(logits, axis=-1)


# -----------------------------------------------------------------------------
# Wrappers
# -----------------------------------------------------------------------------
def pack_bilstm(p):
    """Reorder gates (i,f,g,o) -> (i,f,o,g); concat fwd|bwd input weights & bias
    along lanes (8H lane-dense projection); keep per-direction Whh; cast to bf16."""
    H = p['whh_f'].shape[0]

    def reorder(w):
        return jnp.concatenate(
            [w[..., :2 * H], w[..., 3 * H:4 * H], w[..., 2 * H:3 * H]], axis=-1)

    wih = jnp.concatenate([reorder(p['wih_f']), reorder(p['wih_b'])],
                          axis=-1).astype(jnp.bfloat16)                 # (E, 8H)
    b = jnp.concatenate([reorder(p['b_f']), reorder(p['b_b'])],
                        axis=-1).astype(jnp.float32)                    # (1, 8H)
    whh_f = reorder(p['whh_f']).astype(jnp.bfloat16)                    # (H, 4H)
    whh_b = reorder(p['whh_b']).astype(jnp.bfloat16)
    return wih, whh_f, whh_b, b


def run_bilstm_seq(x2d, wih, whh_f, whh_b, b, T, N):
    E = x2d.shape[1]
    H = whh_f.shape[0]
    return pl.pallas_call(
        bilstm1_kernel,
        grid=(1,),
        in_specs=[
            pl.BlockSpec((T * N, E), lambda i: (0, 0)),
            pl.BlockSpec((E, 8 * H), lambda i: (0, 0)),
            pl.BlockSpec((H, 4 * H), lambda i: (0, 0)),
            pl.BlockSpec((H, 4 * H), lambda i: (0, 0)),
            pl.BlockSpec((1, 8 * H), lambda i: (0, 0)),
        ],
        out_specs=pl.BlockSpec((T, N, 2 * H), lambda i: (0, 0, 0)),
        out_shape=jax.ShapeDtypeStruct((T, N, 2 * H), jnp.bfloat16),
        scratch_shapes=[pltpu.VMEM((T * N, 8 * H), jnp.float32)],
        compiler_params=pltpu.CompilerParams(
            dimension_semantics=("arbitrary",),
            vmem_limit_bytes=_VMEM_LIMIT),
    )(x2d, wih, whh_f, whh_b, b)


def run_attention(h):
    T, N, D = h.shape
    return pl.pallas_call(
        attention_kernel,
        grid=(1,),
        in_specs=[pl.BlockSpec((T, N, D), lambda i: (0, 0, 0))],
        out_specs=pl.BlockSpec((T, N, 4 * D), lambda i: (0, 0, 0)),
        out_shape=jax.ShapeDtypeStruct((T, N, 4 * D), jnp.bfloat16),
        compiler_params=pltpu.CompilerParams(
            dimension_semantics=("arbitrary",),
            vmem_limit_bytes=_VMEM_LIMIT),
    )(h)


def run_bilstm_pool_head(m2d, wih, whh_f, whh_b, b, w_cls, b_cls, T, N, B):
    Din = m2d.shape[1]
    H = whh_f.shape[0]
    F, C = w_cls.shape
    Cp = max(128, ((C + 127) // 128) * 128)            # lane-dense class slab
    w_pad = jnp.zeros((F, Cp), jnp.float32).at[:, :C].set(w_cls).astype(jnp.bfloat16)
    b_pad = jnp.full((1, Cp), -1e30, jnp.float32).at[:, :C].set(b_cls)
    out = pl.pallas_call(
        bilstm2_pool_head_kernel,
        grid=(1,),
        in_specs=[
            pl.BlockSpec((T * N, Din), lambda i: (0, 0)),
            pl.BlockSpec((Din, 8 * H), lambda i: (0, 0)),
            pl.BlockSpec((H, 4 * H), lambda i: (0, 0)),
            pl.BlockSpec((H, 4 * H), lambda i: (0, 0)),
            pl.BlockSpec((1, 8 * H), lambda i: (0, 0)),
            pl.BlockSpec((F, Cp), lambda i: (0, 0)),
            pl.BlockSpec((1, Cp), lambda i: (0, 0)),
        ],
        out_specs=pl.BlockSpec((B, Cp), lambda i: (0, 0)),
        out_shape=jax.ShapeDtypeStruct((B, Cp), jnp.float32),
        scratch_shapes=[pltpu.VMEM((T * N, 8 * H), jnp.float32)],
        compiler_params=pltpu.CompilerParams(
            dimension_semantics=("arbitrary",),
            vmem_limit_bytes=_VMEM_LIMIT),
    )(m2d, wih, whh_f, whh_b, b, w_pad, b_pad)
    return out[:, :C]


def esim_forward(params, sentence1, sentence2):
    B, T = sentence1.shape
    N = 2 * B
    # TODO(synk): embedding gather stays in XLA; a Pallas DMA-gather kernel is
    # not worthwhile at these sizes.  Gather directly in time-major order so no
    # separate transpose pass is needed.
    tok_tm = jnp.concatenate([sentence1, sentence2], axis=0).T        # (T, 2B)
    e_tm = params['embedding'][tok_tm]                                # (T, 2B, E)
    E = e_tm.shape[-1]
    x2d = e_tm.reshape(T * N, E).astype(jnp.bfloat16)                 # (T*N, E)

    wih1, whh1_f, whh1_b, b1 = pack_bilstm(params['lstm1'])
    h = run_bilstm_seq(x2d, wih1, whh1_f, whh1_b, b1, T, N)           # (T, N, 2H1)

    m = run_attention(h)                                              # (T, N, 8H1)
    m2d = m.reshape(T * N, m.shape[-1])                               # view reshape

    wih2, whh2_f, whh2_b, b2 = pack_bilstm(params['lstm2'])
    # Dropout is identity in eval mode.
    return run_bilstm_pool_head(m2d, wih2, whh2_f, whh2_b, b2,
                                params['cls_w'], params['cls_b'], T, N, B)


# -----------------------------------------------------------------------------
# Deterministic parameter init (PyTorch gate order i, f, g, o; combined bias)
# -----------------------------------------------------------------------------
def make_lstm_params(key, in_dim, hidden):
    ks = jax.random.split(key, 6)
    s = 0.1
    return {
        'wih_f': (jax.random.normal(ks[0], (in_dim, 4 * hidden)) * s).astype(jnp.float32),
        'whh_f': (jax.random.normal(ks[1], (hidden, 4 * hidden)) * s).astype(jnp.float32),
        'b_f':   (jax.random.normal(ks[2], (1, 4 * hidden)) * s).astype(jnp.float32),
        'wih_b': (jax.random.normal(ks[3], (in_dim, 4 * hidden)) * s).astype(jnp.float32),
        'whh_b': (jax.random.normal(ks[4], (hidden, 4 * hidden)) * s).astype(jnp.float32),
        'b_b':   (jax.random.normal(ks[5], (1, 4 * hidden)) * s).astype(jnp.float32),
    }


if __name__ == "__main__":
    n_vocab, embed = 50, 32
    hidden_size_1, hidden_size_2 = 16, 16
    num_classes = 4
    B, T = 2, 8

    key = jax.random.PRNGKey(0)
    k_emb, k_l1, k_l2, k_cw, k_cb, k_s1, k_s2 = jax.random.split(key, 7)

    params = {
        'embedding': (jax.random.normal(k_emb, (n_vocab, embed)) * 0.1).astype(jnp.float32),
        'lstm1': make_lstm_params(k_l1, embed, hidden_size_1),
        'lstm2': make_lstm_params(k_l2, 2 * 4 * hidden_size_1, hidden_size_2),
        'cls_w': (jax.random.normal(k_cw, (4 * 2 * hidden_size_2, num_classes)) * 0.1).astype(jnp.float32),
        'cls_b': (jax.random.normal(k_cb, (1, num_classes)) * 0.1).astype(jnp.float32),
    }

    sentence1 = jax.random.randint(k_s1, (B, T), 0, n_vocab, dtype=jnp.int32)
    sentence2 = jax.random.randint(k_s2, (B, T), 0, n_vocab, dtype=jnp.int32)

    out = esim_forward(params, sentence1, sentence2)
    out = jax.block_until_ready(out)

    assert out.shape == (B, num_classes)
    out_np = np.asarray(out)
    row_sums = out_np.sum(axis=-1)
    assert np.allclose(row_sums, 1.0, atol=1e-3), row_sums
    assert np.all(np.isfinite(out_np))
    print("KERNEL_OK")
</pallas_src>

<mosaic_0001>
module attributes {stable_mosaic.version = 11 : i64} {
  func.func @bilstm1_kernel(%arg0: i32, %arg1: memref<32x32xbf16, #tpu.memory_space<vmem>>, %arg2: memref<32x128xbf16, #tpu.memory_space<vmem>>, %arg3: memref<16x64xbf16, #tpu.memory_space<vmem>>, %arg4: memref<16x64xbf16, #tpu.memory_space<vmem>>, %arg5: memref<1x128xf32, #tpu.memory_space<vmem>>, %arg6: memref<8x4x32xbf16, #tpu.memory_space<vmem>>, %arg7: memref<32x128xf32, #tpu.memory_space<vmem>>) attributes {dimension_semantics = [#tpu.dimension_semantics<arbitrary>], iteration_bounds = array<i64: 1>, scalar_prefetch = 0 : i64, scratch_operands = 1 : i64, tpu.core_type = #tpu.core_type<tc>, window_params = [{pipeline_mode = #tpu.pipeline_mode<synchronous>, transform_indices = @transform_0, window_bounds = array<i64: 32, 32>}, {pipeline_mode = #tpu.pipeline_mode<synchronous>, transform_indices = @transform_1, window_bounds = array<i64: 32, 128>}, {pipeline_mode = #tpu.pipeline_mode<synchronous>, transform_indices = @transform_2, window_bounds = array<i64: 16, 64>}, {pipeline_mode = #tpu.pipeline_mode<synchronous>, transform_indices = @transform_3, window_bounds = array<i64: 16, 64>}, {pipeline_mode = #tpu.pipeline_mode<synchronous>, transform_indices = @transform_4, window_bounds = array<i64: 1, 128>}, {pipeline_mode = #tpu.pipeline_mode<synchronous>, transform_indices = @transform_5, window_bounds = array<i64: 8, 4, 32>}]} {
    %c0 = arith.constant 0 : index
    %c0_0 = arith.constant 0 : index
    %0 = vector.load %arg1[%c0, %c0_0] : memref<32x32xbf16, #tpu.memory_space<vmem>>, vector<32x32xbf16>
    %c0_1 = arith.constant 0 : index
    %c0_2 = arith.constant 0 : index
    %1 = vector.load %arg2[%c0_1, %c0_2] : memref<32x128xbf16, #tpu.memory_space<vmem>>, vector<32x128xbf16>
    %cst = arith.constant dense<0.000000e+00> : vector<32x128xf32>
    %2 = tpu.matmul %0, %1, %cst {dimension_numbers = #tpu.dot_dimension_numbers<[1], [0], [0], [1], [0, 0, 1, 1], [], []>} : vector<32x32xbf16>, vector<32x128xbf16>, vector<32x128xf32> -> vector<32x128xf32>
    %c0_3 = arith.constant 0 : index
    %c0_4 = arith.constant 0 : index
    %3 = vector.load %arg5[%c0_3, %c0_4] : memref<1x128xf32, #tpu.memory_space<vmem>>, vector<1x128xf32>
    %4 = vector.broadcast %3 : vector<1x128xf32> to vector<32x128xf32>
    %5 = arith.addf %2, %4 : vector<32x128xf32>
    %c0_5 = arith.constant 0 : index
    %c0_6 = arith.constant 0 : index
    %6 = vector.load %arg7[%c0_5, %c0_6] : memref<32x128xf32, #tpu.memory_space<vmem>>, vector<32x128xf32>
    tpu.vector_store %arg7[%c0_5, %c0_6], %5 {strides = array<i32>} : memref<32x128xf32, #tpu.memory_space<vmem>>, vector<32x128xf32>,
    %c0_7 = arith.constant 0 : index
    %c0_8 = arith.constant 0 : index
    %7 = vector.load %arg3[%c0_7, %c0_8] : memref<16x64xbf16, #tpu.memory_space<vmem>>, vector<16x64xbf16>
    %c0_9 = arith.constant 0 : index
    %c0_10 = arith.constant 0 : index
    %8 = vector.load %arg4[%c0_9, %c0_10] : memref<16x64xbf16, #tpu.memory_space<vmem>>, vector<16x64xbf16>
    %cst_11 = arith.constant 0.000000e+00 : f32
    %9 = vector.broadcast %cst_11 : f32 to vector<4x16xf32>
    %cst_12 = arith.constant 0.000000e+00 : f32
    %10 = vector.broadcast %cst_12 : f32 to vector<4x16xf32>
    %cst_13 = arith.constant 0.000000e+00 : f32
    %11 = vector.broadcast %cst_13 : f32 to vector<4x16xf32>
    %cst_14 = arith.constant 0.000000e+00 : f32
    %12 = vector.broadcast %cst_14 : f32 to vector<4x16xf32>
    %13 = arith.truncf %9 : vector<4x16xf32> to vector<4x16xbf16>
    %cst_15 = arith.constant dense<0.000000e+00> : vector<4x64xf32>
    %14 = tpu.matmul %13, %7, %cst_15 {dimension_numbers = #tpu.dot_dimension_numbers<[1], [0], [0], [1], [0, 0, 1, 1], [], []>} : vector<4x16xbf16>, vector<16x64xbf16>, vector<4x64xf32> -> vector<4x64xf32>
    %15 = arith.truncf %11 : vector<4x16xf32> to vector<4x16xbf16>
    %cst_16 = arith.constant dense<0.000000e+00> : vector<4x64xf32>
    %16 = tpu.matmul %15, %8, %cst_16 {dimension_numbers = #tpu.dot_dimension_numbers<[1], [0], [0], [1], [0, 0, 1, 1], [], []>} : vector<4x16xbf16>, vector<16x64xbf16>, vector<4x64xf32> -> vector<4x64xf32>
    %c0_17 = arith.constant 0 : index
    %c0_18 = arith.constant 0 : index
    %17 = vector.load %arg7[%c0_17, %c0_18] : memref<32x128xf32, #tpu.memory_space<vmem>>, vector<4x64xf32>
    %18 = arith.addf %17, %14 : vector<4x64xf32>
    %c28 = arith.constant 28 : index
    %c64 = arith.constant 64 : index
    %19 = vector.load %arg7[%c28, %c64] : memref<32x128xf32, #tpu.memory_space<vmem>>, vector<4x64xf32>
    %20 = arith.addf %19, %16 : vector<4x64xf32>
    %21 = vector.extract_strided_slice %18 {offsets = [0, 0], sizes = [4, 48], strides = [1, 1]} : vector<4x64xf32> to vector<4x48xf32>
    %22 = arith.negf %21 : vector<4x48xf32>
    %23 = math.exp %22 : vector<4x48xf32>
    %cst_19 = arith.constant 1.000000e+00 : f32
    %24 = vector.broadcast %cst_19 : f32 to vector<4x48xf32>
    %25 = arith.addf %24, %23 : vector<4x48xf32>
    %26 = arith.divf %24, %25 : vector<4x48xf32>
    %27 = vector.extract_strided_slice %18 {offsets = [0, 48], sizes = [4, 16], strides = [1, 1]} : vector<4x64xf32> to vector<4x16xf32>
    %28 = math.tanh %27 : vector<4x16xf32>
    %29 = vector.extract_strided_slice %20 {offsets = [0, 0], sizes = [4, 48], strides = [1, 1]} : vector<4x64xf32> to vector<4x48xf32>
    %30 = arith.negf %29 : vector<4x48xf32>
    %31 = math.exp %30 : vector<4x48xf32>
    %cst_20 = arith.constant 1.000000e+00 : f32
    %32 = vector.broadcast %cst_20 : f32 to vector<4x48xf32>
    %33 = arith.addf %32, %31 : vector<4x48xf32>
    %34 = arith.divf %32, %33 : vector<4x48xf32>
    %35 = vector.extract_strided_slice %20 {offsets = [0, 48], sizes = [4, 16], strides = [1, 1]} : vector<4x64xf32> to vector<4x16xf32>
    %36 = math.tanh %35 : vector<4x16xf32>
    %37 = vector.extract_strided_slice %26 {offsets = [0, 16], sizes = [4, 16], strides = [1, 1]} : vector<4x48xf32> to vector<4x16xf32>
    %38 = arith.mulf %37, %10 : vector<4x16xf32>
    %39 = vector.extract_strided_slice %26 {offsets = [0, 0], sizes = [4, 16], strides = [1, 1]} : vector<4x48xf32> to vector<4x16xf32>
    %40 = arith.mulf %39, %28 : vector<4x16xf32>
    %41 = arith.addf %38, %40 : vector<4x16xf32>
    %42 = vector.extract_strided_slice %34 {offsets = [0, 16], sizes = [4, 16], strides = [1, 1]} : vector<4x48xf32> to vector<4x16xf32>
    %43 = arith.mulf %42, %12 : vector<4x16xf32>
    %44 = vector.extract_strided_slice %34 {offsets = [0, 0], sizes = [4, 16], strides = [1, 1]} : vector<4x48xf32> to vector<4x16xf32>
    %45 = arith.mulf %44, %36 : vector<4x16xf32>
    %46 = arith.addf %43, %45 : vector<4x16xf32>
    %47 = vector.extract_strided_slice %26 {offsets = [0, 32], sizes = [4, 16], strides = [1, 1]} : vector<4x48xf32> to vector<4x16xf32>
    %48 = math.tanh %41 : vector<4x16xf32>
    %49 = arith.mulf %47, %48 : vector<4x16xf32>
    %50 = vector.extract_strided_slice %34 {offsets = [0, 32], sizes = [4, 16], strides = [1, 1]} : vector<4x48xf32> to vector<4x16xf32>
    %51 = math.tanh %46 : vector<4x16xf32>
    %52 = arith.mulf %50, %51 : vector<4x16xf32>
    %53 = arith.truncf %49 : vector<4x16xf32> to vector<4x16xbf16>
    %cst_21 = arith.constant dense<0.000000e+00> : vector<4x64xf32>
    %54 = tpu.matmul %53, %7, %cst_21 {dimension_numbers = #tpu.dot_dimension_numbers<[1], [0], [0], [1], [0, 0, 1, 1], [], []>} : vector<4x16xbf16>, vector<16x64xbf16>, vector<4x64xf32> -> vector<4x64xf32>
    %55 = arith.truncf %52 : vector<4x16xf32> to vector<4x16xbf16>
    %cst_22 = arith.constant dense<0.000000e+00> : vector<4x64xf32>
    %56 = tpu.matmul %55, %8, %cst_22 {dimension_numbers = #tpu.dot_dimension_numbers<[1], [0], [0], [1], [0, 0, 1, 1], [], []>} : vector<4x16xbf16>, vector<16x64xbf16>, vector<4x64xf32> -> vector<4x64xf32>
    %c4 = arith.constant 4 : index
    %c0_23 = arith.constant 0 : index
    %57 = vector.load %arg7[%c4, %c0_23] : memref<32x128xf32, #tpu.memory_space<vmem>>, vector<4x64xf32>
    %58 = arith.addf %57, %54 : vector<4x64xf32>
    %c24 = arith.constant 24 : index
    %c64_24 = arith.constant 64 : index
    %59 = vector.load %arg7[%c24, %c64_24] : memref<32x128xf32, #tpu.memory_space<vmem>>, vector<4x64xf32>
    %60 = arith.addf %59, %56 : vector<4x64xf32>
    %61 = vector.extract_strided_slice %58 {offsets = [0, 0], sizes = [4, 48], strides = [1, 1]} : vector<4x64xf32> to vector<4x48xf32>
    %62 = arith.negf %61 : vector<4x48xf32>
    %63 = math.exp %62 : vector<4x48xf32>
    %cst_25 = arith.constant 1.000000e+00 : f32
    %64 = vector.broadcast %cst_25 : f32 to vector<4x48xf32>
    %65 = arith.addf %64, %63 : vector<4x48xf32>
    %66 = arith.divf %64, %65 : vector<4x48xf32>
    %67 = vector.extract_strided_slice %58 {offsets = [0, 48], sizes = [4, 16], strides = [1, 1]} : vector<4x64xf32> to vector<4x16xf32>
    %68 = math.tanh %67 : vector<4x16xf32>
    %69 = vector.extract_strided_slice %60 {offsets = [0, 0], sizes = [4, 48], strides = [1, 1]} : vector<4x64xf32> to vector<4x48xf32>
    %70 = arith.negf %69 : vector<4x48xf32>
    %71 = math.exp %70 : vector<4x48xf32>
    %cst_26 = arith.constant 1.000000e+00 : f32
    %72 = vector.broadcast %cst_26 : f32 to vector<4x48xf32>
    %73 = arith.addf %72, %71 : vector<4x48xf32>
    %74 = arith.divf %72, %73 : vector<4x48xf32>
    %75 = vector.extract_strided_slice %60 {offsets = [0, 48], sizes = [4, 16], strides = [1, 1]} : vector<4x64xf32> to vector<4x16xf32>
    %76 = math.tanh %75 : vector<4x16xf32>
    %77 = vector.extract_strided_slice %66 {offsets = [0, 16], sizes = [4, 16], strides = [1, 1]} : vector<4x48xf32> to vector<4x16xf32>
    %78 = arith.mulf %77, %41 : vector<4x16xf32>
    %79 = vector.extract_strided_slice %66 {offsets = [0, 0], sizes = [4, 16], strides = [1, 1]} : vector<4x48xf32> to vector<4x16xf32>
    %80 = arith.mulf %79, %68 : vector<4x16xf32>
    %81 = arith.addf %78, %80 : vector<4x16xf32>
    %82 = vector.extract_strided_slice %74 {offsets = [0, 16], sizes = [4, 16], strides = [1, 1]} : vector<4x48xf32> to vector<4x16xf32>
    %83 = arith.mulf %82, %46 : vector<4x16xf32>
    %84 = vector.extract_strided_slice %74 {offsets = [0, 0], sizes = [4, 16], strides = [1, 1]} : vector<4x48xf32> to vector<4x16xf32>
    %85 = arith.mulf %84, %76 : vector<4x16xf32>
    %86 = arith.addf %83, %85 : vector<4x16xf32>
    %87 = vector.extract_strided_slice %66 {offsets = [0, 32], sizes = [4, 16], strides = [1, 1]} : vector<4x48xf32> to vector<4x16xf32>
    %88 = math.tanh %81 : vector<4x16xf32>
    %89 = arith.mulf %87, %88 : vector<4x16xf32>
    %90 = vector.extract_strided_slice %74 {offsets = [0, 32], sizes = [4, 16], strides = [1, 1]} : vector<4x48xf32> to vector<4x16xf32>
    %91 = math.tanh %86 : vector<4x16xf32>
    %92 = arith.mulf %90, %91 : vector<4x16xf32>
    %93 = arith.truncf %89 : vector<4x16xf32> to vector<4x16xbf16>
    %cst_27 = arith.constant dense<0.000000e+00> : vector<4x64xf32>
    %94 = tpu.matmul %93, %7, %cst_27 {dimension_numbers = #tpu.dot_dimension_numbers<[1], [0], [0], [1], [0, 0, 1, 1], [], []>} : vector<4x16xbf16>, vector<16x64xbf16>, vector<4x64xf32> -> vector<4x64xf32>
    %95 = arith.truncf %92 : vector<4x16xf32> to vector<4x16xbf16>
    %cst_28 = arith.constant dense<0.000000e+00> : vector<4x64xf32>
    %96 = tpu.matmul %95, %8, %cst_28 {dimension_numbers = #tpu.dot_dimension_numbers<[1], [0], [0], [1], [0, 0, 1, 1], [], []>} : vector<4x16xbf16>, vector<16x64xbf16>, vector<4x64xf32> -> vector<4x64xf32>
    %c8 = arith.constant 8 : index
    %c0_29 = arith.constant 0 : index
    %97 = vector.load %arg7[%c8, %c0_29] : memref<32x128xf32, #tpu.memory_space<vmem>>, vector<4x64xf32>
    %98 = arith.addf %97, %94 : vector<4x64xf32>
    %c20 = arith.constant 20 : index
    %c64_30 = arith.constant 64 : index
    %99 = vector.load %arg7[%c20, %c64_30] : memref<32x128xf32, #tpu.memory_space<vmem>>, vector<4x64xf32>
    %100 = arith.addf %99, %96 : vector<4x64xf32>
    %101 = vector.extract_strided_slice %98 {offsets = [0, 0], sizes = [4, 48], strides = [1, 1]} : vector<4x64xf32> to vector<4x48xf32>
    %102 = arith.negf %101 : vector<4x48xf32>
    %103 = math.exp %102 : vector<4x48xf32>
    %cst_31 = arith.constant 1.000000e+00 : f32
    %104 = vector.broadcast %cst_31 : f32 to vector<4x48xf32>
    %105 = arith.addf %104, %103 : vector<4x48xf32>
    %106 = arith.divf %104, %105 : vector<4x48xf32>
    %107 = vector.extract_strided_slice %98 {offsets = [0, 48], sizes = [4, 16], strides = [1, 1]} : vector<4x64xf32> to vector<4x16xf32>
    %108 = math.tanh %107 : vector<4x16xf32>
    %109 = vector.extract_strided_slice %100 {offsets = [0, 0], sizes = [4, 48], strides = [1, 1]} : vector<4x64xf32> to vector<4x48xf32>
    %110 = arith.negf %109 : vector<4x48xf32>
    %111 = math.exp %110 : vector<4x48xf32>
    %cst_32 = arith.constant 1.000000e+00 : f32
    %112 = vector.broadcast %cst_32 : f32 to vector<4x48xf32>
    %113 = arith.addf %112, %111 : vector<4x48xf32>
    %114 = arith.divf %112, %113 : vector<4x48xf32>
    %115 = vector.extract_strided_slice %100 {offsets = [0, 48], sizes = [4, 16], strides = [1, 1]} : vector<4x64xf32> to vector<4x16xf32>
    %116 = math.tanh %115 : vector<4x16xf32>
    %117 = vector.extract_strided_slice %106 {offsets = [0, 16], sizes = [4, 16], strides = [1, 1]} : vector<4x48xf32> to vector<4x16xf32>
    %118 = arith.mulf %117, %81 : vector<4x16xf32>
    %119 = vector.extract_strided_slice %106 {offsets = [0, 0], sizes = [4, 16], strides = [1, 1]} : vector<4x48xf32> to vector<4x16xf32>
    %120 = arith.mulf %119, %108 : vector<4x16xf32>
    %121 = arith.addf %118, %120 : vector<4x16xf32>
    %122 = vector.extract_strided_slice %114 {offsets = [0, 16], sizes = [4, 16], strides = [1, 1]} : vector<4x48xf32> to vector<4x16xf32>
    %123 = arith.mulf %122, %86 : vector<4x16xf32>
    %124 = vector.extract_strided_slice %114 {offsets = [0, 0], sizes = [4, 16], strides = [1, 1]} : vector<4x48xf32> to vector<4x16xf32>
    %125 = arith.mulf %124, %116 : vector<4x16xf32>
    %126 = arith.addf %123, %125 : vector<4x16xf32>
    %127 = vector.extract_strided_slice %106 {offsets = [0, 32], sizes = [4, 16], strides = [1, 1]} : vector<4x48xf32> to vector<4x16xf32>
    %128 = math.tanh %121 : vector<4x16xf32>
    %129 = arith.mulf %127, %128 : vector<4x16xf32>
    %130 = vector.extract_strided_slice %114 {offsets = [0, 32], sizes = [4, 16], strides = [1, 1]} : vector<4x48xf32> to vector<4x16xf32>
    %131 = math.tanh %126 : vector<4x16xf32>
    %132 = arith.mulf %130, %131 : vector<4x16xf32>
    %133 = arith.truncf %129 : vector<4x16xf32> to vector<4x16xbf16>
    %cst_33 = arith.constant dense<0.000000e+00> : vector<4x64xf32>
    %134 = tpu.matmul %133, %7, %cst_33 {dimension_numbers = #tpu.dot_dimension_numbers<[1], [0], [0], [1], [0, 0, 1, 1], [], []>} : vector<4x16xbf16>, vector<16x64xbf16>, vector<4x64xf32> -> vector<4x64xf32>
    %135 = arith.truncf %132 : vector<4x16xf32> to vector<4x16xbf16>
    %cst_34 = arith.constant dense<0.000000e+00> : vector<4x64xf32>
    %136 = tpu.matmul %135, %8, %cst_34 {dimension_numbers = #tpu.dot_dimension_numbers<[1], [0], [0], [1], [0, 0, 1, 1], [], []>} : vector<4x16xbf16>, vector<16x64xbf16>, vector<4x64xf32> -> vector<4x64xf32>
    %c12 = arith.constant 12 : index
    %c0_35 = arith.constant 0 : index
    %137 = vector.load %arg7[%c12, %c0_35] : memref<32x128xf32, #tpu.memory_space<vmem>>, vector<4x64xf32>
    %138 = arith.addf %137, %134 : vector<4x64xf32>
    %c16 = arith.constant 16 : index
    %c64_36 = arith.constant 64 : index
    %139 = vector.load %arg7[%c16, %c64_36] : memref<32x128xf32, #tpu.memory_space<vmem>>, vector<4x64xf32>
    %140 = arith.addf %139, %136 : vector<4x64xf32>
    %141 = vector.extract_strided_slice %138 {offsets = [0, 0], sizes = [4, 48], strides = [1, 1]} : vector<4x64xf32> to vector<4x48xf32>
    %142 = arith.negf %141 : vector<4x48xf32>
    %143 = math.exp %142 : vector<4x48xf32>
    %cst_37 = arith.constant 1.000000e+00 : f32
    %144 = vector.broadcast %cst_37 : f32 to vector<4x48xf32>
    %145 = arith.addf %144, %143 : vector<4x48xf32>
    %146 = arith.divf %144, %145 : vector<4x48xf32>
    %147 = vector.extract_strided_slice %138 {offsets = [0, 48], sizes = [4, 16], strides = [1, 1]} : vector<4x64xf32> to vector<4x16xf32>
    %148 = math.tanh %147 : vector<4x16xf32>
    %149 = vector.extract_strided_slice %140 {offsets = [0, 0], sizes = [4, 48], strides = [1, 1]} : vector<4x64xf32> to vector<4x48xf32>
    %150 = arith.negf %149 : vector<4x48xf32>
    %151 = math.exp %150 : vector<4x48xf32>
    %cst_38 = arith.constant 1.000000e+00 : f32
    %152 = vector.broadcast %cst_38 : f32 to vector<4x48xf32>
    %153 = arith.addf %152, %151 : vector<4x48xf32>
    %154 = arith.divf %152, %153 : vector<4x48xf32>
    %155 = vector.extract_strided_slice %140 {offsets = [0, 48], sizes = [4, 16], strides = [1, 1]} : vector<4x64xf32> to vector<4x16xf32>
    %156 = math.tanh %155 : vector<4x16xf32>
    %157 = vector.extract_strided_slice %146 {offsets = [0, 16], sizes = [4, 16], strides = [1, 1]} : vector<4x48xf32> to vector<4x16xf32>
    %158 = arith.mulf %157, %121 : vector<4x16xf32>
    %159 = vector.extract_strided_slice %146 {offsets = [0, 0], sizes = [4, 16], strides = [1, 1]} : vector<4x48xf32> to vector<4x16xf32>
    %160 = arith.mulf %159, %148 : vector<4x16xf32>
    %161 = arith.addf %158, %160 : vector<4x16xf32>
    %162 = vector.extract_strided_slice %154 {offsets = [0, 16], sizes = [4, 16], strides = [1, 1]} : vector<4x48xf32> to vector<4x16xf32>
    %163 = arith.mulf %162, %126 : vector<4x16xf32>
    %164 = vector.extract_strided_slice %154 {offsets = [0, 0], sizes = [4, 16], strides = [1, 1]} : vector<4x48xf32> to vector<4x16xf32>
    %165 = arith.mulf %164, %156 : vector<4x16xf32>
    %166 = arith.addf %163, %165 : vector<4x16xf32>
    %167 = vector.extract_strided_slice %146 {offsets = [0, 32], sizes = [4, 16], strides = [1, 1]} : vector<4x48xf32> to vector<4x16xf32>
    %168 = math.tanh %161 : vector<4x16xf32>
    %169 = arith.mulf %167, %168 : vector<4x16xf32>
    %170 = vector.extract_strided_slice %154 {offsets = [0, 32], sizes = [4, 16], strides = [1, 1]} : vector<4x48xf32> to vector<4x16xf32>
    %171 = math.tanh %166 : vector<4x16xf32>
    %172 = arith.mulf %170, %171 : vector<4x16xf32>
    %173 = arith.truncf %169 : vector<4x16xf32> to vector<4x16xbf16>
    %cst_39 = arith.constant dense<0.000000e+00> : vector<4x64xf32>
    %174 = tpu.matmul %173, %7, %cst_39 {dimension_numbers = #tpu.dot_dimension_numbers<[1], [0], [0], [1], [0, 0, 1, 1], [], []>} : vector<4x16xbf16>, vector<16x64xbf16>, vector<4x64xf32> -> vector<4x64xf32>
    %175 = arith.truncf %172 : vector<4x16xf32> to vector<4x16xbf16>
    %cst_40 = arith.constant dense<0.000000e+00> : vector<4x64xf32>
    %176 = tpu.matmul %175, %8, %cst_40 {dimension_numbers = #tpu.dot_dimension_numbers<[1], [0], [0], [1], [0, 0, 1, 1], [], []>} : vector<4x16xbf16>, vector<16x64xbf16>, vector<4x64xf32> -> vector<4x64xf32>
    %c16_41 = arith.constant 16 : index
    %c0_42 = arith.constant 0 : index
    %177 = vector.load %arg7[%c16_41, %c0_42] : memref<32x128xf32, #tpu.memory_space<vmem>>, vector<4x64xf32>
    %178 = arith.addf %177, %174 : vector<4x64xf32>
    %c12_43 = arith.constant 12 : index
    %c64_44 = arith.constant 64 : index
    %179 = vector.load %arg7[%c12_43, %c64_44] : memref<32x128xf32, #tpu.memory_space<vmem>>, vector<4x64xf32>
    %180 = arith.addf %179, %176 : vector<4x64xf32>
    %181 = vector.extract_strided_slice %178 {offsets = [0, 0], sizes = [4, 48], strides = [1, 1]} : vector<4x64xf32> to vector<4x48xf32>
    %182 = arith.negf %181 : vector<4x48xf32>
    %183 = math.exp %182 : vector<4x48xf32>
    %cst_45 = arith.constant 1.000000e+00 : f32
    %184 = vector.broadcast %cst_45 : f32 to vector<4x48xf32>
    %185 = arith.addf %184, %183 : vector<4x48xf32>
    %186 = arith.divf %184, %185 : vector<4x48xf32>
    %187 = vector.extract_strided_slice %178 {offsets = [0, 48], sizes = [4, 16], strides = [1, 1]} : vector<4x64xf32> to vector<4x16xf32>
    %188 = math.tanh %187 : vector<4x16xf32>
    %189 = vector.extract_strided_slice %180 {offsets = [0, 0], sizes = [4, 48], strides = [1, 1]} : vector<4x64xf32> to vector<4x48xf32>
    %190 = arith.negf %189 : vector<4x48xf32>
    %191 = math.exp %190 : vector<4x48xf32>
    %cst_46 = arith.constant 1.000000e+00 : f32
    %192 = vector.broadcast %cst_46 : f32 to vector<4x48xf32>
    %193 = arith.addf %192, %191 : vector<4x48xf32>
    %194 = arith.divf %192, %193 : vector<4x48xf32>
    %195 = vector.extract_strided_slice %180 {offsets = [0, 48], sizes = [4, 16], strides = [1, 1]} : vector<4x64xf32> to vector<4x16xf32>
    %196 = math.tanh %195 : vector<4x16xf32>
    %197 = vector.extract_strided_slice %186 {offsets = [0, 16], sizes = [4, 16], strides = [1, 1]} : vector<4x48xf32> to vector<4x16xf32>
    %198 = arith.mulf %197, %161 : vector<4x16xf32>
    %199 = vector.extract_strided_slice %186 {offsets = [0, 0], sizes = [4, 16], strides = [1, 1]} : vector<4x48xf32> to vector<4x16xf32>
    %200 = arith.mulf %199, %188 : vector<4x16xf32>
    %201 = arith.addf %198, %200 : vector<4x16xf32>
    %202 = vector.extract_strided_slice %194 {offsets = [0, 16], sizes = [4, 16], strides = [1, 1]} : vector<4x48xf32> to vector<4x16xf32>
    %203 = arith.mulf %202, %166 : vector<4x16xf32>
    %204 = vector.extract_strided_slice %194 {offsets = [0, 0], sizes = [4, 16], strides = [1, 1]} : vector<4x48xf32> to vector<4x16xf32>
    %205 = arith.mulf %204, %196 : vector<4x16xf32>
    %206 = arith.addf %203, %205 : vector<4x16xf32>
    %207 = vector.extract_strided_slice %186 {offsets = [0, 32], sizes = [4, 16], strides = [1, 1]} : vector<4x48xf32> to vector<4x16xf32>
    %208 = math.tanh %201 : vector<4x16xf32>
    %209 = arith.mulf %207, %208 : vector<4x16xf32>
    %210 = vector.extract_strided_slice %194 {offsets = [0, 32], sizes = [4, 16], strides = [1, 1]} : vector<4x48xf32> to vector<4x16xf32>
    %211 = math.tanh %206 : vector<4x16xf32>
    %212 = arith.mulf %210, %211 : vector<4x16xf32>
    %213 = arith.truncf %209 : vector<4x16xf32> to vector<4x16xbf16>
    %cst_47 = arith.constant dense<0.000000e+00> : vector<4x64xf32>
    %214 = tpu.matmul %213, %7, %cst_47 {dimension_numbers = #tpu.dot_dimension_numbers<[1], [0], [0], [1], [0, 0, 1, 1], [], []>} : vector<4x16xbf16>, vector<16x64xbf16>, vector<4x64xf32> -> vector<4x64xf32>
    %215 = arith.truncf %212 : vector<4x16xf32> to vector<4x16xbf16>
    %cst_48 = arith.constant dense<0.000000e+00> : vector<4x64xf32>
    %216 = tpu.matmul %215, %8, %cst_48 {dimension_numbers = #tpu.dot_dimension_numbers<[1], [0], [0], [1], [0, 0, 1, 1], [], []>} : vector<4x16xbf16>, vector<16x64xbf16>, vector<4x64xf32> -> vector<4x64xf32>
    %c20_49 = arith.constant 20 : index
    %c0_50 = arith.constant 0 : index
    %217 = vector.load %arg7[%c20_49, %c0_50] : memref<32x128xf32, #tpu.memory_space<vmem>>, vector<4x64xf32>
    %218 = arith.addf %217, %214 : vector<4x64xf32>
    %c8_51 = arith.constant 8 : index
    %c64_52 = arith.constant 64 : index
    %219 = vector.load %arg7[%c8_51, %c64_52] : memref<32x128xf32, #tpu.memory_space<vmem>>, vector<4x64xf32>
    %220 = arith.addf %219, %216 : vector<4x64xf32>
    %221 = vector.extract_strided_slice %218 {offsets = [0, 0], sizes = [4, 48], strides = [1, 1]} : vector<4x64xf32> to vector<4x48xf32>
    %222 = arith.negf %221 : vector<4x48xf32>
    %223 = math.exp %222 : vector<4x48xf32>
    %cst_53 = arith.constant 1.000000e+00 : f32
    %224 = vector.broadcast %cst_53 : f32 to vector<4x48xf32>
    %225 = arith.addf %224, %223 : vector<4x48xf32>
    %226 = arith.divf %224, %225 : vector<4x48xf32>
    %227 = vector.extract_strided_slice %218 {offsets = [0, 48], sizes = [4, 16], strides = [1, 1]} : vector<4x64xf32> to vector<4x16xf32>
    %228 = math.tanh %227 : vector<4x16xf32>
    %229 = vector.extract_strided_slice %220 {offsets = [0, 0], sizes = [4, 48], strides = [1, 1]} : vector<4x64xf32> to vector<4x48xf32>
    %230 = arith.negf %229 : vector<4x48xf32>
    %231 = math.exp %230 : vector<4x48xf32>
    %cst_54 = arith.constant 1.000000e+00 : f32
    %232 = vector.broadcast %cst_54 : f32 to vector<4x48xf32>
    %233 = arith.addf %232, %231 : vector<4x48xf32>
    %234 = arith.divf %232, %233 : vector<4x48xf32>
    %235 = vector.extract_strided_slice %220 {offsets = [0, 48], sizes = [4, 16], strides = [1, 1]} : vector<4x64xf32> to vector<4x16xf32>
    %236 = math.tanh %235 : vector<4x16xf32>
    %237 = vector.extract_strided_slice %226 {offsets = [0, 16], sizes = [4, 16], strides = [1, 1]} : vector<4x48xf32> to vector<4x16xf32>
    %238 = arith.mulf %237, %201 : vector<4x16xf32>
    %239 = vector.extract_strided_slice %226 {offsets = [0, 0], sizes = [4, 16], strides = [1, 1]} : vector<4x48xf32> to vector<4x16xf32>
    %240 = arith.mulf %239, %228 : vector<4x16xf32>
    %241 = arith.addf %238, %240 : vector<4x16xf32>
    %242 = vector.extract_strided_slice %234 {offsets = [0, 16], sizes = [4, 16], strides = [1, 1]} : vector<4x48xf32> to vector<4x16xf32>
    %243 = arith.mulf %242, %206 : vector<4x16xf32>
    %244 = vector.extract_strided_slice %234 {offsets = [0, 0], sizes = [4, 16], strides = [1, 1]} : vector<4x48xf32> to vector<4x16xf32>
    %245 = arith.mulf %244, %236 : vector<4x16xf32>
    %246 = arith.addf %243, %245 : vector<4x16xf32>
    %247 = vector.extract_strided_slice %226 {offsets = [0, 32], sizes = [4, 16], strides = [1, 1]} : vector<4x48xf32> to vector<4x16xf32>
    %248 = math.tanh %241 : vector<4x16xf32>
    %249 = arith.mulf %247, %248 : vector<4x16xf32>
    %250 = vector.extract_strided_slice %234 {offsets = [0, 32], sizes = [4, 16], strides = [1, 1]} : vector<4x48xf32> to vector<4x16xf32>
    %251 = math.tanh %246 : vector<4x16xf32>
    %252 = arith.mulf %250, %251 : vector<4x16xf32>
    %253 = arith.truncf %249 : vector<4x16xf32> to vector<4x16xbf16>
    %cst_55 = arith.constant dense<0.000000e+00> : vector<4x64xf32>
    %254 = tpu.matmul %253, %7, %cst_55 {dimension_numbers = #tpu.dot_dimension_numbers<[1], [0], [0], [1], [0, 0, 1, 1], [], []>} : vector<4x16xbf16>, vector<16x64xbf16>, vector<4x64xf32> -> vector<4x64xf32>
    %255 = arith.truncf %252 : vector<4x16xf32> to vector<4x16xbf16>
    %cst_56 = arith.constant dense<0.000000e+00> : vector<4x64xf32>
    %256 = tpu.matmul %255, %8, %cst_56 {dimension_numbers = #tpu.dot_dimension_numbers<[1], [0], [0], [1], [0, 0, 1, 1], [], []>} : vector<4x16xbf16>, vector<16x64xbf16>, vector<4x64xf32> -> vector<4x64xf32>
    %c24_57 = arith.constant 24 : index
    %c0_58 = arith.constant 0 : index
    %257 = vector.load %arg7[%c24_57, %c0_58] : memref<32x128xf32, #tpu.memory_space<vmem>>, vector<4x64xf32>
    %258 = arith.addf %257, %254 : vector<4x64xf32>
    %c4_59 = arith.constant 4 : index
    %c64_60 = arith.constant 64 : index
    %259 = vector.load %arg7[%c4_59, %c64_60] : memref<32x128xf32, #tpu.memory_space<vmem>>, vector<4x64xf32>
    %260 = arith.addf %259, %256 : vector<4x64xf32>
    %261 = vector.extract_strided_slice %258 {offsets = [0, 0], sizes = [4, 48], strides = [1, 1]} : vector<4x64xf32> to vector<4x48xf32>
    %262 = arith.negf %261 : vector<4x48xf32>
    %263 = math.exp %262 : vector<4x48xf32>
    %cst_61 = arith.constant 1.000000e+00 : f32
    %264 = vector.broadcast %cst_61 : f32 to vector<4x48xf32>
    %265 = arith.addf %264, %263 : vector<4x48xf32>
    %266 = arith.divf %264, %265 : vector<4x48xf32>
    %267 = vector.extract_strided_slice %258 {offsets = [0, 48], sizes = [4, 16], strides = [1, 1]} : vector<4x64xf32> to vector<4x16xf32>
    %268 = math.tanh %267 : vector<4x16xf32>
    %269 = vector.extract_strided_slice %260 {offsets = [0, 0], sizes = [4, 48], strides = [1, 1]} : vector<4x64xf32> to vector<4x48xf32>
    %270 = arith.negf %269 : vector<4x48xf32>
    %271 = math.exp %270 : vector<4x48xf32>
    %cst_62 = arith.constant 1.000000e+00 : f32
    %272 = vector.broadcast %cst_62 : f32 to vector<4x48xf32>
    %273 = arith.addf %272, %271 : vector<4x48xf32>
    %274 = arith.divf %272, %273 : vector<4x48xf32>
    %275 = vector.extract_strided_slice %260 {offsets = [0, 48], sizes = [4, 16], strides = [1, 1]} : vector<4x64xf32> to vector<4x16xf32>
    %276 = math.tanh %275 : vector<4x16xf32>
    %277 = vector.extract_strided_slice %266 {offsets = [0, 16], sizes = [4, 16], strides = [1, 1]} : vector<4x48xf32> to vector<4x16xf32>
    %278 = arith.mulf %277, %241 : vector<4x16xf32>
    %279 = vector.extract_strided_slice %266 {offsets = [0, 0], sizes = [4, 16], strides = [1, 1]} : vector<4x48xf32> to vector<4x16xf32>
    %280 = arith.mulf %279, %268 : vector<4x16xf32>
    %281 = arith.addf %278, %280 : vector<4x16xf32>
    %282 = vector.extract_strided_slice %274 {offsets = [0, 16], sizes = [4, 16], strides = [1, 1]} : vector<4x48xf32> to vector<4x16xf32>
    %283 = arith.mulf %282, %246 : vector<4x16xf32>
    %284 = vector.extract_strided_slice %274 {offsets = [0, 0], sizes = [4, 16], strides = [1, 1]} : vector<4x48xf32> to vector<4x16xf32>
    %285 = arith.mulf %284, %276 : vector<4x16xf32>
    %286 = arith.addf %283, %285 : vector<4x16xf32>
    %287 = vector.extract_strided_slice %266 {offsets = [0, 32], sizes = [4, 16], strides = [1, 1]} : vector<4x48xf32> to vector<4x16xf32>
    %288 = math.tanh %281 : vector<4x16xf32>
    %289 = arith.mulf %287, %288 : vector<4x16xf32>
    %290 = vector.extract_strided_slice %274 {offsets = [0, 32], sizes = [4, 16], strides = [1, 1]} : vector<4x48xf32> to vector<4x16xf32>
    %291 = math.tanh %286 : vector<4x16xf32>
    %292 = arith.mulf %290, %291 : vector<4x16xf32>
    %293 = arith.truncf %289 : vector<4x16xf32> to vector<4x16xbf16>
    %cst_63 = arith.constant dense<0.000000e+00> : vector<4x64xf32>
    %294 = tpu.matmul %293, %7, %cst_63 {dimension_numbers = #tpu.dot_dimension_numbers<[1], [0], [0], [1], [0, 0, 1, 1], [], []>} : vector<4x16xbf16>, vector<16x64xbf16>, vector<4x64xf32> -> vector<4x64xf32>
    %295 = arith.truncf %292 : vector<4x16xf32> to vector<4x16xbf16>
    %cst_64 = arith.constant dense<0.000000e+00> : vector<4x64xf32>
    %296 = tpu.matmul %295, %8, %cst_64 {dimension_numbers = #tpu.dot_dimension_numbers<[1], [0], [0], [1], [0, 0, 1, 1], [], []>} : vector<4x16xbf16>, vector<16x64xbf16>, vector<4x64xf32> -> vector<4x64xf32>
    %c28_65 = arith.constant 28 : index
    %c0_66 = arith.constant 0 : index
    %297 = vector.load %arg7[%c28_65, %c0_66] : memref<32x128xf32, #tpu.memory_space<vmem>>, vector<4x64xf32>
    %298 = arith.addf %297, %294 : vector<4x64xf32>
    %c0_67 = arith.constant 0 : index
    %c64_68 = arith.constant 64 : index
    %299 = vector.load %arg7[%c0_67, %c64_68] : memref<32x128xf32, #tpu.memory_space<vmem>>, vector<4x64xf32>
    %300 = arith.addf %299, %296 : vector<4x64xf32>
    %301 = vector.extract_strided_slice %298 {offsets = [0, 0], sizes = [4, 48], strides = [1, 1]} : vector<4x64xf32> to vector<4x48xf32>
    %302 = arith.negf %301 : vector<4x48xf32>
    %303 = math.exp %302 : vector<4x48xf32>
    %cst_69 = arith.constant 1.000000e+00 : f32
    %304 = vector.broadcast %cst_69 : f32 to vector<4x48xf32>
    %305 = arith.addf %304, %303 : vector<4x48xf32>
    %306 = arith.divf %304, %305 : vector<4x48xf32>
    %307 = vector.extract_strided_slice %298 {offsets = [0, 48], sizes = [4, 16], strides = [1, 1]} : vector<4x64xf32> to vector<4x16xf32>
    %308 = math.tanh %307 : vector<4x16xf32>
    %309 = vector.extract_strided_slice %300 {offsets = [0, 0], sizes = [4, 48], strides = [1, 1]} : vector<4x64xf32> to vector<4x48xf32>
    %310 = arith.negf %309 : vector<4x48xf32>
    %311 = math.exp %310 : vector<4x48xf32>
    %cst_70 = arith.constant 1.000000e+00 : f32
    %312 = vector.broadcast %cst_70 : f32 to vector<4x48xf32>
    %313 = arith.addf %312, %311 : vector<4x48xf32>
    %314 = arith.divf %312, %313 : vector<4x48xf32>
    %315 = vector.extract_strided_slice %300 {offsets = [0, 48], sizes = [4, 16], strides = [1, 1]} : vector<4x64xf32> to vector<4x16xf32>
    %316 = math.tanh %315 : vector<4x16xf32>
    %317 = vector.extract_strided_slice %306 {offsets = [0, 16], sizes = [4, 16], strides = [1, 1]} : vector<4x48xf32> to vector<4x16xf32>
    %318 = arith.mulf %317, %281 : vector<4x16xf32>
    %319 = vector.extract_strided_slice %306 {offsets = [0, 0], sizes = [4, 16], strides = [1, 1]} : vector<4x48xf32> to vector<4x16xf32>
    %320 = arith.mulf %319, %308 : vector<4x16xf32>
    %321 = arith.addf %318, %320 : vector<4x16xf32>
    %322 = vector.extract_strided_slice %314 {offsets = [0, 16], sizes = [4, 16], strides = [1, 1]} : vector<4x48xf32> to vector<4x16xf32>
    %323 = arith.mulf %322, %286 : vector<4x16xf32>
    %324 = vector.extract_strided_slice %314 {offsets = [0, 0], sizes = [4, 16], strides = [1, 1]} : vector<4x48xf32> to vector<4x16xf32>
    %325 = arith.mulf %324, %316 : vector<4x16xf32>
    %326 = arith.addf %323, %325 : vector<4x16xf32>
    %327 = vector.extract_strided_slice %306 {offsets = [0, 32], sizes = [4, 16], strides = [1, 1]} : vector<4x48xf32> to vector<4x16xf32>
    %328 = math.tanh %321 : vector<4x16xf32>
    %329 = arith.mulf %327, %328 : vector<4x16xf32>
    %330 = vector.extract_strided_slice %314 {offsets = [0, 32], sizes = [4, 16], strides = [1, 1]} : vector<4x48xf32> to vector<4x16xf32>
    %331 = math.tanh %326 : vector<4x16xf32>
    %332 = arith.mulf %330, %331 : vector<4x16xf32>
    %333 = vector.shape_cast %49 : vector<4x16xf32> to vector<1x4x16xf32>
    %334 = vector.shape_cast %89 : vector<4x16xf32> to vector<1x4x16xf32>
    %335 = vector.shape_cast %129 : vector<4x16xf32> to vector<1x4x16xf32>
    %336 = vector.shape_cast %169 : vector<4x16xf32> to vector<1x4x16xf32>
    %337 = vector.shape_cast %209 : vector<4x16xf32> to vector<1x4x16xf32>
    %338 = vector.shape_cast %249 : vector<4x16xf32> to vector<1x4x16xf32>
    %339 = vector.shape_cast %289 : vector<4x16xf32> to vector<1x4x16xf32>
    %340 = vector.shape_cast %329 : vector<4x16xf32> to vector<1x4x16xf32>
    %341 = tpu.concatenate %333, %334, %335, %336, %337, %338, %339, %340 in 0 : vector<1x4x16xf32>, vector<1x4x16xf32>, vector<1x4x16xf32>, vector<1x4x16xf32>, vector<1x4x16xf32>, vector<1x4x16xf32>, vector<1x4x16xf32>, vector<1x4x16xf32> -> vector<8x4x16xf32>
    %342 = vector.shape_cast %332 : vector<4x16xf32> to vector<1x4x16xf32>
    %343 = vector.shape_cast %292 : vector<4x16xf32> to vector<1x4x16xf32>
    %344 = vector.shape_cast %252 : vector<4x16xf32> to vector<1x4x16xf32>
    %345 = vector.shape_cast %212 : vector<4x16xf32> to vector<1x4x16xf32>
    %346 = vector.shape_cast %172 : vector<4x16xf32> to vector<1x4x16xf32>
    %347 = vector.shape_cast %132 : vector<4x16xf32> to vector<1x4x16xf32>
    %348 = vector.shape_cast %92 : vector<4x16xf32> to vector<1x4x16xf32>
    %349 = vector.shape_cast %52 : vector<4x16xf32> to vector<1x4x16xf32>
    %350 = tpu.concatenate %342, %343, %344, %345, %346, %347, %348, %349 in 0 : vector<1x4x16xf32>, vector<1x4x16xf32>, vector<1x4x16xf32>, vector<1x4x16xf32>, vector<1x4x16xf32>, vector<1x4x16xf32>, vector<1x4x16xf32>, vector<1x4x16xf32> -> vector<8x4x16xf32>
    %351 = tpu.concatenate %341, %350 in 2 : vector<8x4x16xf32>, vector<8x4x16xf32> -> vector<8x4x32xf32>
    %352 = arith.truncf %351 : vector<8x4x32xf32> to vector<8x4x32xbf16>
    %c0_71 = arith.constant 0 : index
    %c0_72 = arith.constant 0 : index
    %c0_73 = arith.constant 0 : index
    %353 = vector.load %arg6[%c0_71, %c0_72, %c0_73] : memref<8x4x32xbf16, #tpu.memory_space<vmem>>, vector<8x4x32xbf16>
    tpu.vector_store %arg6[%c0_71, %c0_72, %c0_73], %352 {strides = array<i32>} : memref<8x4x32xbf16, #tpu.memory_space<vmem>>, vector<8x4x32xbf16>,
    return
  }
  func.func @transform_0(%arg0: i32) -> (i32, i32) {
    %c0_i32 = arith.constant 0 : i32
    %c0_i32_0 = arith.constant 0 : i32
    %c0_i32_1 = arith.constant 0 : i32
    return %c0_i32, %c0_i32_0 : i32, i32
  }
  func.func @transform_1(%arg0: i32) -> (i32, i32) {
    %c0_i32 = arith.constant 0 : i32
    %c0_i32_0 = arith.constant 0 : i32
    %c0_i32_1 = arith.constant 0 : i32
    return %c0_i32, %c0_i32_0 : i32, i32
  }
  func.func @transform_2(%arg0: i32) -> (i32, i32) {
    %c0_i32 = arith.constant 0 : i32
    %c0_i32_0 = arith.constant 0 : i32
    %c0_i32_1 = arith.constant 0 : i32
    return %c0_i32, %c0_i32_0 : i32, i32
  }
  func.func @transform_3(%arg0: i32) -> (i32, i32) {
    %c0_i32 = arith.constant 0 : i32
    %c0_i32_0 = arith.constant 0 : i32
    %c0_i32_1 = arith.constant 0 : i32
    return %c0_i32, %c0_i32_0 : i32, i32
  }
  func.func @transform_4(%arg0: i32) -> (i32, i32) {
    %c0_i32 = arith.constant 0 : i32
    %c0_i32_0 = arith.constant 0 : i32
    %c0_i32_1 = arith.constant 0 : i32
    return %c0_i32, %c0_i32_0 : i32, i32
  }
  func.func @transform_5(%arg0: i32) -> (i32, i32, i32) {
    %c0_i32 = arith.constant 0 : i32
    %c0_i32_0 = arith.constant 0 : i32
    %c0_i32_1 = arith.constant 0 : i32
    %c0_i32_2 = arith.constant 0 : i32
    return %c0_i32, %c0_i32_0, %c0_i32_1 : i32, i32, i32
  }
}

</mosaic_0001>

<llo_original>
// kernel: tpu_custom_call.1
$region0: #{tpu_custom_call.1}
  #allocation0 [shape = 'u32[]', space=smem, size = 0x4, offset = 0x4, fixed_abs, tag = 'smem constant byte address 0x4 - core index']
  #allocation1 [shape = 'u32[144,128]{1,0:T(1,128)}', space=vmem, size = 0x12000, scoped, tag = 'internal scratch']
  #allocation2 [shape = 'f32[32,128]{1,0:T(8,128)}', space=vmem, size = 0x4000, scoped, tag = 'scratch operand']
  %s0 = inlined_call_operand.hbm [shape: bf16[32,32], index: 0, kind: input, shape index: {}]
  %s1 = inlined_call_operand.hbm [shape: bf16[32,128], index: 1, kind: input, shape index: {}]
  %s2 = inlined_call_operand.hbm [shape: bf16[16,64], index: 2, kind: input, shape index: {}]
  %s3 = inlined_call_operand.hbm [shape: bf16[16,64], index: 3, kind: input, shape index: {}]
  %s4 = inlined_call_operand.vmem [shape: f32[1,128], index: 4, kind: input, shape index: {}]
  %s5 = inlined_call_operand.hbm [shape: bf16[8,4,32], index: 5, kind: output, shape index: {}]
  %s6 = sld [smem:[#allocation0]]
  $region46: #{tpu_custom_call.1} parent=0
    _
  %s8 = ssub.s32 1, %s6
  %s9 = scalar_select 0, %s8, %s6
  $region1: #{tpu_custom_call.1} parent=0
    #allocation3 [shape = 'u8[8192]{0}', space=vmem, size = 0x2000, scoped, tag = 'input window, operand 0, single buffered']
    #allocation4 [shape = 's32[1]{0}', space=sflag, size = 0x4, scoped, tag = 'scoped memory for tpu_custom_call.1']
    #allocation5 [shape = 's32[1]{0}', space=sflag, size = 0x4, scoped, tag = 'scoped memory for tpu_custom_call.1']
    #allocation6 [shape = 'u8[8192]{0}', space=vmem, size = 0x2000, scoped, tag = 'input window, operand 1, single buffered']
    #allocation7 [shape = 's32[1]{0}', space=sflag, size = 0x4, scoped, tag = 'scoped memory for tpu_custom_call.1']
    #allocation8 [shape = 'u8[4096]{0}', space=vmem, size = 0x1000, scoped, tag = 'input window, operand 2, single buffered']
    #allocation9 [shape = 'u8[4096]{0}', space=vmem, size = 0x1000, scoped, tag = 'input window, operand 3, single buffered']
    #allocation10 [shape = 's32[1]{0}', space=sflag, size = 0x4, scoped, tag = 'scoped memory for tpu_custom_call.1']
    #allocation11 [shape = 'u8[8192]{0}', space=vmem, size = 0x2000, scoped, tag = 'output window, operand 0, single buffered']
    %10 = vsyncpa [#allocation4], 0
    %11 = vsyncpa [#allocation7], 0
    %12 = vsyncpa [#allocation10], 0
    %13 = vsyncpa [#allocation5], 0
    // Predicated region
    $region2: #{tpu_custom_call.1} parent=1 // pred_check
      _
    $region3: #{tpu_custom_call.1} parent=1 // pred_check_branch
      %15 = sbr.rel (0) target = $region5
    $region4: #{tpu_custom_call.1} parent=1 // pred_region
      %s17 = ssub.s32 256, 256
      %18 = vsyncadd [#allocation4], %s17
      %s19 = sshll.u32 [#allocation3], 4
      %s20 = int_to_ptr.vmem [resolvable:$true] %s19
      %25 = dma.hbm_to_vmem [thread:$0]  %s0, 256, %s20, [#allocation4], 64, 64, 4
    $region5: #{tpu_custom_call.1} parent=1 // pred_fallthru
      _
    // Predicated region
    $region6: #{tpu_custom_call.1} parent=1 // pred_check
      _
    $region7: #{tpu_custom_call.1} parent=1 // pred_check_branch
      %27 = sbr.rel (0) target = $region9
    $region8: #{tpu_custom_call.1} parent=1 // pred_region
      %s29 = ssub.s32 256, 256
      %30 = vsyncadd [#allocation7], %s29
      %s31 = sshll.u32 [#allocation6], 4
      %s32 = int_to_ptr.vmem [resolvable:$true] %s31
      %37 = dma.hbm_to_vmem [thread:$0]  %s1, 256, %s32, [#allocation7], 64, 64, 4
    $region9: #{tpu_custom_call.1} parent=1 // pred_fallthru
      _
    // Predicated region
    $region10: #{tpu_custom_call.1} parent=1 // pred_check
      _
    $region11: #{tpu_custom_call.1} parent=1 // pred_check_branch
      %39 = sbr.rel (0) target = $region13
    $region12: #{tpu_custom_call.1} parent=1 // pred_region
      %s41 = ssub.s32 128, 128
      %42 = vsyncadd [#allocation7], %s41
      %s43 = sshll.u32 [#allocation8], 4
      %s44 = int_to_ptr.vmem [resolvable:$true] %s43
      %49 = dma.hbm_to_vmem [thread:$0]  %s2, 128, %s44, [#allocation7], 64, 64, 4
    $region13: #{tpu_custom_call.1} parent=1 // pred_fallthru
      _
    // Predicated region
    $region14: #{tpu_custom_call.1} parent=1 // pred_check
      _
    $region15: #{tpu_custom_call.1} parent=1 // pred_check_branch
      %51 = sbr.rel (0) target = $region17
    $region16: #{tpu_custom_call.1} parent=1 // pred_region
      %s53 = ssub.s32 128, 128
      %54 = vsyncadd [#allocation10], %s53
      %s55 = sshll.u32 [#allocation9], 4
      %s56 = int_to_ptr.vmem [resolvable:$true] %s55
      %61 = dma.hbm_to_vmem [thread:$0]  %s3, 128, %s56, [#allocation10], 64, 64, 4
    $region17: #{tpu_custom_call.1} parent=1 // pred_fallthru
      _
    // Predicated region
    $region18: #{tpu_custom_call.1} parent=1 // pred_check
      _
    $region19: #{tpu_custom_call.1} parent=1 // pred_check_branch
      %63 = sbr.rel (0) target = $region21
    $region20: #{tpu_custom_call.1} parent=1 // pred_region
      _
    $region21: #{tpu_custom_call.1} parent=1 // pred_fallthru
      _
    // Predicated region
    $region22: #{tpu_custom_call.1} parent=1 // pred_check
      _
    $region23: #{tpu_custom_call.1} parent=1 // pred_check_branch
      %65 = sbr.rel (0) target = $region25
    $region24: #{tpu_custom_call.1} parent=1 // pred_region
      %66 = dma.done [#allocation4], 256
    $region25: #{tpu_custom_call.1} parent=1 // pred_fallthru
      _
    // Predicated region
    $region26: #{tpu_custom_call.1} parent=1 // pred_check
      _
    $region27: #{tpu_custom_call.1} parent=1 // pred_check_branch
      %68 = sbr.rel (0) target = $region29
    $region28: #{tpu_custom_call.1} parent=1 // pred_region
      %69 = dma.done [#allocation7], 256
    $region29: #{tpu_custom_call.1} parent=1 // pred_fallthru
      _
    // Predicated region
    $region30: #{tpu_custom_call.1} parent=1 // pred_check
      _
    $region31: #{tpu_custom_call.1} parent=1 // pred_check_branch
      %71 = sbr.rel (0) target = $region33
    $region32: #{tpu_custom_call.1} parent=1 // pred_region
      %72 = dma.done [#allocation7], 128
    $region33: #{tpu_custom_call.1} parent=1 // pred_fallthru
      _
    // Predicated region
    $region34: #{tpu_custom_call.1} parent=1 // pred_check
      _
    $region35: #{tpu_custom_call.1} parent=1 // pred_check_branch
      %74 = sbr.rel (0) target = $region37
    $region36: #{tpu_custom_call.1} parent=1 // pred_region
      %75 = dma.done [#allocation10], 128
    $region37: #{tpu_custom_call.1} parent=1 // pred_fallthru
      _
    %v77 = vld [vmem:[#allocation3] sm:$0xf]
    %v78 = vld [vmem:[#allocation3 + $0x4] sm:$0xf]
    %v79 = vld [vmem:[#allocation3 + $0x8] sm:$0xf]
    %v80 = vld [vmem:[#allocation3 + $0xc] sm:$0xf]
    %v81 = vld [vmem:[#allocation6] sm:$0xf]
    %v82 = vld [vmem:[#allocation6 + $0x4] sm:$0xf]
    %v83 = vld [vmem:[#allocation6 + $0x8] sm:$0xf]
    %v84 = vld [vmem:[#allocation6 + $0xc] sm:$0xf]
    %v85 = vld [vmem:[%s4] sm:$0x1]
    %v87 = vlaneseq
    %v88 = vshrl.u32 %v87, 7
    %v89 = vsub.s32 0, %v88
    %v90 = vrot.slane %v85, %v89
    %v96 = vunpack.c.l.b16 %v77
    %v97 = vunpack.c.l.b16 %v78
    %v98 = vunpack.c.l.b16 %v79
    %v99 = vunpack.c.l.b16 %v80
    %v100 = vpack.c.b16 %v97, %v96
    %v101 = vpack.c.b16 %v99, %v98
    %v106 = vunpack.c.l.b16 %v81
    %v107 = vunpack.c.l.b16 %v82
    %v108 = vunpack.c.l.b16 %v83
    %v109 = vunpack.c.l.b16 %v84
    %v110 = vpack.c.b16 %v107, %v106
    %v111 = vpack.c.b16 %v109, %v108
    %vm114 = vcmask 261120
    %v116 = vsel %vm114, %v100, 0
    %v119 = vsel %vm114, %v101, 0
    %121 = vmatprep.subr.bf16.mxu0 0
    %122 = vmatpush1.bf16.msra.mxu0 0
    %123 = vmatprep.subr.bf16.mxu0 0
    %124 = vmatpush1.bf16.msra.mxu0 0
    %125 = vmatprep.subr.bf16.mxu0 0
    %126 = vmatpush1.bf16.msra.mxu0 0
    %127 = vmatprep.subr.bf16.mxu0 0
    %128 = vmatpush1.bf16.msra.mxu0 0
    %129 = vmatprep.subr.bf16.mxu0 0
    %130 = vmatpush1.bf16.msra.mxu0 0
    %131 = vmatprep.subr.bf16.mxu0 0
    %132 = vmatpush1.bf16.msra.mxu0 0
    %133 = vmatprep.subr.bf16.mxu0 0
    %134 = vmatpush1.bf16.msra.mxu0 %v111
    %135 = vmatprep.subr.bf16.mxu0 0
    %136 = vmatpush1.bf16.msra.mxu0 %v110
    %137 = vmatprep.subr.bf16.mxu0 0
    %138 = vmatpush2.bf16.msra.mxu0 0
    %139 = vmatprep.subr.bf16.mxu0 0
    %140 = vmatpush2.bf16.msra.mxu0 0
    %141 = vmatprep.subr.bf16.mxu0 0
    %142 = vmatpush2.bf16.msra.mxu0 0
    %143 = vmatprep.subr.bf16.mxu0 0
    %144 = vmatpush2.bf16.msra.mxu0 0
    %145 = vmatprep.subr.bf16.mxu0 0
    %146 = vmatpush2.bf16.msra.mxu0 0
    %147 = vmatprep.subr.bf16.mxu0 0
    %148 = vmatpush2.bf16.msra.mxu0 0
    %149 = vmatprep.subr.bf16.mxu0 0
    %150 = vmatpush2.bf16.msra.mxu0 0
    %151 = vmatprep.subr.bf16.mxu0 0
    %152 = vmatpush2.bf16.msra.mxu0 0
    %153 = vmatprep.mubr.bf16.mxu0 0
    %154 = vmatmul.mubr.bf16.gmra.mxu0 %v116
    %v155 = vpop.f32.mrf.mxu0
    %v156 = vadd.f32 %v90, %v155
    %v157 = vpop.f32.mrf.mxu0
    %v158 = vpop.f32.mrf.mxu0
    %v159 = vadd.f32 %v90, %v158
    %v160 = vpop.f32.mrf.mxu0
    %161 = vmatprep.mubr.bf16.mxu0 0
    %162 = vmatmul.mubr.bf16.gmra.mxu0 %v119
    %v163 = vpop.f32.mrf.mxu0
    %v164 = vadd.f32 %v90, %v163
    %v165 = vpop.f32.mrf.mxu0
    %v166 = vpop.f32.mrf.mxu0
    %v167 = vadd.f32 %v90, %v166
    %v168 = vpop.f32.mrf.mxu0
    %169 = vdwg.mxu0
    %170 = vst [vmem:[#allocation2] sm:$0xff] %v156
    %171 = vst [vmem:[#allocation2 + $0x8] sm:$0xff] %v159
    %172 = vst [vmem:[#allocation2 + $0x10] sm:$0xff] %v164
    %173 = vst [vmem:[#allocation2 + $0x18] sm:$0xff] %v167
    %v174 = vld [vmem:[#allocation8] sm:$0xf]
    %v175 = vld [vmem:[#allocation8 + $0x4] sm:$0xf]
    %v176 = vld [vmem:[#allocation9] sm:$0xf]
    %v177 = vld [vmem:[#allocation9 + $0x4] sm:$0xf]
    %v180 = vunpack.c.l.b16 %v174
    %v181 = vunpack.c.l.b16 %v175
    %v182 = vpack.c.b16 %v181, %v180
    %vm184 = vcmask 130048
    %v186 = vsel %vm184, 0, 0
    %188 = vmatprep.subr.bf16.mxu0 0
    %189 = vmatpush1.bf16.msra.mxu0 0
    %190 = vmatprep.subr.bf16.mxu0 0
    %191 = vmatpush1.bf16.msra.mxu0 0
    %192 = vmatprep.subr.bf16.mxu0 0
    %193 = vmatpush1.bf16.msra.mxu0 0
    %194 = vmatprep.subr.bf16.mxu0 0
    %195 = vmatpush1.bf16.msra.mxu0 0
    %196 = vmatprep.subr.bf16.mxu0 0
    %197 = vmatpush1.bf16.msra.mxu0 0
    %198 = vmatprep.subr.bf16.mxu0 0
    %199 = vmatpush1.bf16.msra.mxu0 0
    %200 = vmatprep.subr.bf16.mxu0 0
    %201 = vmatpush1.bf16.msra.mxu0 0
    %202 = vmatprep.subr.bf16.mxu0 0
    %203 = vmatpush1.bf16.msra.mxu0 %v182
    %204 = vmatprep.subr.bf16.mxu0 0
    %205 = vmatpush2.bf16.msra.mxu0 0
    %206 = vmatprep.subr.bf16.mxu0 0
    %207 = vmatpush2.bf16.msra.mxu0 0
    %208 = vmatprep.subr.bf16.mxu0 0
    %209 = vmatpush2.bf16.msra.mxu0 0
    %210 = vmatprep.subr.bf16.mxu0 0
    %211 = vmatpush2.bf16.msra.mxu0 0
    %212 = vmatprep.subr.bf16.mxu0 0
    %213 = vmatpush2.bf16.msra.mxu0 0
    %214 = vmatprep.subr.bf16.mxu0 0
    %215 = vmatpush2.bf16.msra.mxu0 0
    %216 = vmatprep.subr.bf16.mxu0 0
    %217 = vmatpush2.bf16.msra.mxu0 0
    %218 = vmatprep.subr.bf16.mxu0 0
    %219 = vmatpush2.bf16.msra.mxu0 0
    %220 = vmatprep.mubr.bf16.mxu0 0
    %221 = vmatmul.mubr.bf16.gmra.mxu0 %v186
    %v222 = vpop.f32.mrf.mxu0
    %v223 = vadd.f32 0.0, %v222
    %v224 = vpop.f32.mrf.mxu0
    %v225 = vpop.f32.mrf.mxu0
    %v226 = vpop.f32.mrf.mxu0
    %227 = vdwg.mxu0
    %v230 = vunpack.c.l.b16 %v176
    %v231 = vunpack.c.l.b16 %v177
    %v232 = vpack.c.b16 %v231, %v230
    %234 = vmatprep.subr.bf16.mxu0 0
    %235 = vmatpush1.bf16.msra.mxu0 0
    %236 = vmatprep.subr.bf16.mxu0 0
    %237 = vmatpush1.bf16.msra.mxu0 0
    %238 = vmatprep.subr.bf16.mxu0 0
    %239 = vmatpush1.bf16.msra.mxu0 0
    %240 = vmatprep.subr.bf16.mxu0 0
    %241 = vmatpush1.bf16.msra.mxu0 0
    %242 = vmatprep.subr.bf16.mxu0 0
    %243 = vmatpush1.bf16.msra.mxu0 0
    %244 = vmatprep.subr.bf16.mxu0 0
    %245 = vmatpush1.bf16.msra.mxu0 0
    %246 = vmatprep.subr.bf16.mxu0 0
    %247 = vmatpush1.bf16.msra.mxu0 0
    %248 = vmatprep.subr.bf16.mxu0 0
    %249 = vmatpush1.bf16.msra.mxu0 %v232
    %250 = vmatprep.subr.bf16.mxu0 0
    %251 = vmatpush2.bf16.msra.mxu0 0
    %252 = vmatprep.subr.bf16.mxu0 0
    %253 = vmatpush2.bf16.msra.mxu0 0
    %254 = vmatprep.subr.bf16.mxu0 0
    %255 = vmatpush2.bf16.msra.mxu0 0
    %256 = vmatprep.subr.bf16.mxu0 0
    %257 = vmatpush2.bf16.msra.mxu0 0
    %258 = vmatprep.subr.bf16.mxu0 0
    %259 = vmatpush2.bf16.msra.mxu0 0
    %260 = vmatprep.subr.bf16.mxu0 0
    %261 = vmatpush2.bf16.msra.mxu0 0
    %262 = vmatprep.subr.bf16.mxu0 0
    %263 = vmatpush2.bf16.msra.mxu0 0
    %264 = vmatprep.subr.bf16.mxu0 0
    %265 = vmatpush2.bf16.msra.mxu0 0
    %266 = vmatprep.mubr.bf16.mxu0 0
    %267 = vmatmul.mubr.bf16.gmra.mxu0 %v186
    %v268 = vpop.f32.mrf.mxu0
    %v269 = vadd.f32 0.0, %v268
    %v270 = vpop.f32.mrf.mxu0
    %v271 = vpop.f32.mrf.mxu0
    %v272 = vpop.f32.mrf.mxu0
    %273 = vdwg.mxu0
    %v274 = vld [vmem:[#allocation2] sm:$0xf]
    %v275 = vadd.f32 %v274, %v223
    %v276 = vld [vmem:[#allocation2 + $0x1c] sm:$0xf]
    %278 = vrot.lane.b32.xlu0 %v269, 64
    %v279 = vpop.permute.xlu0 %278
    %v281 = vadd.f32 %v276, %v279
    %v282 = vxor.u32 %v275, 2147483648
    %v283 = vmul.f32 %v282, 1.442695
    %v284 = vpow.pop %v283
    %v285 = vadd.f32 %v284, 1.0
    %v286 = vrcp.pop %v285
    %v287 = vmul.f32 1.0, %v286
    %v288 = vtanh.pop %v275
    %v289 = vxor.u32 %v281, 2147483648
    %v290 = vmul.f32 %v289, 1.442695
    %v291 = vpow.pop %v290
    %v292 = vadd.f32 %v291, 1.0
    %v293 = vrcp.pop %v292
    %v294 = vmul.f32 1.0, %v293
    %v295 = vtanh.pop %v281
    %v296 = vmul.f32 %v287, 0.0
    %298 = vrot.lane.b32.xlu0 %v288, 80
    %v299 = vpop.permute.xlu0 %298
    %v301 = vmul.f32 %v287, %v299
    %303 = vrot.lane.b32.xlu0 %v301, 16
    %v304 = vpop.permute.xlu0 %303
    %v306 = vadd.f32 %v296, %v304
    %v307 = vmul.f32 %v294, 0.0
    %309 = vrot.lane.b32.xlu0 %v295, 80
    %v310 = vpop.permute.xlu0 %309
    %v312 = vmul.f32 %v294, %v310
    %314 = vrot.lane.b32.xlu0 %v312, 16
    %v315 = vpop.permute.xlu0 %314
    %v317 = vadd.f32 %v307, %v315
    %v318 = vtanh.pop %v306
    %320 = vrot.lane.b32.xlu0 %v318, 16
    %v321 = vpop.permute.xlu0 %320
    %v323 = vmul.f32 %v287, %v321
    %v324 = vtanh.pop %v317
    %326 = vrot.lane.b32.xlu0 %v324, 16
    %v327 = vpop.permute.xlu0 %326
    %v329 = vmul.f32 %v294, %v327
    %v330 = vpack.c.bf16 %v323, %v323
    %332 = vrot.lane.b32.xlu0 %v330, 96
    %v333 = vpop.permute.xlu0 %332
    %v335 = vsel %vm184, %v333, 0
    %337 = vmatprep.subr.bf16.mxu0 0
    %338 = vmatpush1.bf16.msra.mxu0 0
    %339 = vmatprep.subr.bf16.mxu0 0
    %340 = vmatpush1.bf16.msra.mxu0 0
    %341 = vmatprep.subr.bf16.mxu0 0
    %342 = vmatpush1.bf16.msra.mxu0 0
    %343 = vmatprep.subr.bf16.mxu0 0
    %344 = vmatpush1.bf16.msra.mxu0 0
    %345 = vmatprep.subr.bf16.mxu0 0
    %346 = vmatpush1.bf16.msra.mxu0 0
    %347 = vmatprep.subr.bf16.mxu0 0
    %348 = vmatpush1.bf16.msra.mxu0 0
    %349 = vmatprep.subr.bf16.mxu0 0
    %350 = vmatpush1.bf16.msra.mxu0 0
    %351 = vmatprep.subr.bf16.mxu0 0
    %352 = vmatpush1.bf16.msra.mxu0 %v182
    %353 = vmatprep.subr.bf16.mxu0 0
    %354 = vmatpush2.bf16.msra.mxu0 0
    %355 = vmatprep.subr.bf16.mxu0 0
    %356 = vmatpush2.bf16.msra.mxu0 0
    %357 = vmatprep.subr.bf16.mxu0 0
    %358 = vmatpush2.bf16.msra.mxu0 0
    %359 = vmatprep.subr.bf16.mxu0 0
    %360 = vmatpush2.bf16.msra.mxu0 0
    %361 = vmatprep.subr.bf16.mxu0 0
    %362 = vmatpush2.bf16.msra.mxu0 0
    %363 = vmatprep.subr.bf16.mxu0 0
    %364 = vmatpush2.bf16.msra.mxu0 0
    %365 = vmatprep.subr.bf16.mxu0 0
    %366 = vmatpush2.bf16.msra.mxu0 0
    %367 = vmatprep.subr.bf16.mxu0 0
    %368 = vmatpush2.bf16.msra.mxu0 0
    %369 = vmatprep.mubr.bf16.mxu0 0
    %370 = vmatmul.mubr.bf16.gmra.mxu0 %v335
    %v371 = vpop.f32.mrf.mxu0
    %v372 = vadd.f32 0.0, %v371
    %v373 = vpop.f32.mrf.mxu0
    %v374 = vpop.f32.mrf.mxu0
    %v375 = vpop.f32.mrf.mxu0
    %376 = vdwg.mxu0
    %v377 = vpack.c.bf16 %v329, %v329
    %379 = vrot.lane.b32.xlu0 %v377, 32
    %v380 = vpop.permute.xlu0 %379
    %v382 = vsel %vm184, %v380, 0
    %384 = vmatprep.subr.bf16.mxu0 0
    %385 = vmatpush1.bf16.msra.mxu0 0
    %386 = vmatprep.subr.bf16.mxu0 0
    %387 = vmatpush1.bf16.msra.mxu0 0
    %388 = vmatprep.subr.bf16.mxu0 0
    %389 = vmatpush1.bf16.msra.mxu0 0
    %390 = vmatprep.subr.bf16.mxu0 0
    %391 = vmatpush1.bf16.msra.mxu0 0
    %392 = vmatprep.subr.bf16.mxu0 0
    %393 = vmatpush1.bf16.msra.mxu0 0
    %394 = vmatprep.subr.bf16.mxu0 0
    %395 = vmatpush1.bf16.msra.mxu0 0
    %396 = vmatprep.subr.bf16.mxu0 0
    %397 = vmatpush1.bf16.msra.mxu0 0
    %398 = vmatprep.subr.bf16.mxu0 0
    %399 = vmatpush1.bf16.msra.mxu0 %v232
    %400 = vmatprep.subr.bf16.mxu0 0
    %401 = vmatpush2.bf16.msra.mxu0 0
    %402 = vmatprep.subr.bf16.mxu0 0
    %403 = vmatpush2.bf16.msra.mxu0 0
    %404 = vmatprep.subr.bf16.mxu0 0
    %405 = vmatpush2.bf16.msra.mxu0 0
    %406 = vmatprep.subr.bf16.mxu0 0
    %407 = vmatpush2.bf16.msra.mxu0 0
    %408 = vmatprep.subr.bf16.mxu0 0
    %409 = vmatpush2.bf16.msra.mxu0 0
    %410 = vmatprep.subr.bf16.mxu0 0
    %411 = vmatpush2.bf16.msra.mxu0 0
    %412 = vmatprep.subr.bf16.mxu0 0
    %413 = vmatpush2.bf16.msra.mxu0 0
    %414 = vmatprep.subr.bf16.mxu0 0
    %415 = vmatpush2.bf16.msra.mxu0 0
    %416 = vmatprep.mubr.bf16.mxu0 0
    %417 = vmatmul.mubr.bf16.gmra.mxu0 %v382
    %v418 = vpop.f32.mrf.mxu0
    %v419 = vadd.f32 0.0, %v418
    %v420 = vpop.f32.mrf.mxu0
    %v421 = vpop.f32.mrf.mxu0
    %v422 = vpop.f32.mrf.mxu0
    %423 = vdwg.mxu0
    %v424 = vld [vmem:[#allocation2 + $0x4] sm:$0xf]
    %v425 = vadd.f32 %v424, %v372
    %v426 = vld [vmem:[#allocation2 + $0x18] sm:$0xf]
    %428 = vrot.lane.b32.xlu0 %v419, 64
    %v429 = vpop.permute.xlu0 %428
    %v431 = vadd.f32 %v426, %v429
    %v432 = vxor.u32 %v425, 2147483648
    %v433 = vmul.f32 %v432, 1.442695
    %v434 = vpow.pop %v433
    %v435 = vadd.f32 %v434, 1.0
    %v436 = vrcp.pop %v435
    %v437 = vmul.f32 1.0, %v436
    %v438 = vtanh.pop %v425
    %v439 = vxor.u32 %v431, 2147483648
    %v440 = vmul.f32 %v439, 1.442695
    %v441 = vpow.pop %v440
    %v442 = vadd.f32 %v441, 1.0
    %v443 = vrcp.pop %v442
    %v444 = vmul.f32 1.0, %v443
    %v445 = vtanh.pop %v431
    %v446 = vmul.f32 %v437, %v306
    %448 = vrot.lane.b32.xlu0 %v438, 80
    %v449 = vpop.permute.xlu0 %448
    %v451 = vmul.f32 %v437, %v449
    %453 = vrot.lane.b32.xlu0 %v451, 16
    %v454 = vpop.permute.xlu0 %453
    %v456 = vadd.f32 %v446, %v454
    %v457 = vmul.f32 %v444, %v317
    %459 = vrot.lane.b32.xlu0 %v445, 80
    %v460 = vpop.permute.xlu0 %459
    %v462 = vmul.f32 %v444, %v460
    %464 = vrot.lane.b32.xlu0 %v462, 16
    %v465 = vpop.permute.xlu0 %464
    %v467 = vadd.f32 %v457, %v465
    %v468 = vtanh.pop %v456
    %470 = vrot.lane.b32.xlu0 %v468, 16
    %v471 = vpop.permute.xlu0 %470
    %v473 = vmul.f32 %v437, %v471
    %v474 = vtanh.pop %v467
    %476 = vrot.lane.b32.xlu0 %v474, 16
    %v477 = vpop.permute.xlu0 %476
    %v479 = vmul.f32 %v444, %v477
    %v480 = vpack.c.bf16 %v473, %v473
    %482 = vrot.lane.b32.xlu0 %v480, 96
    %v483 = vpop.permute.xlu0 %482
    %v485 = vsel %vm184, %v483, 0
    %487 = vmatprep.subr.bf16.mxu0 0
    %488 = vmatpush1.bf16.msra.mxu0 0
    %489 = vmatprep.subr.bf16.mxu0 0
    %490 = vmatpush1.bf16.msra.mxu0 0
    %491 = vmatprep.subr.bf16.mxu0 0
    %492 = vmatpush1.bf16.msra.mxu0 0
    %493 = vmatprep.subr.bf16.mxu0 0
    %494 = vmatpush1.bf16.msra.mxu0 0
    %495 = vmatprep.subr.bf16.mxu0 0
    %496 = vmatpush1.bf16.msra.mxu0 0
    %497 = vmatprep.subr.bf16.mxu0 0
    %498 = vmatpush1.bf16.msra.mxu0 0
    %499 = vmatprep.subr.bf16.mxu0 0
    %500 = vmatpush1.bf16.msra.mxu0 0
    %501 = vmatprep.subr.bf16.mxu0 0
    %502 = vmatpush1.bf16.msra.mxu0 %v182
    %503 = vmatprep.subr.bf16.mxu0 0
    %504 = vmatpush2.bf16.msra.mxu0 0
    %505 = vmatprep.subr.bf16.mxu0 0
    %506 = vmatpush2.bf16.msra.mxu0 0
    %507 = vmatprep.subr.bf16.mxu0 0
    %508 = vmatpush2.bf16.msra.mxu0 0
    %509 = vmatprep.subr.bf16.mxu0 0
    %510 = vmatpush2.bf16.msra.mxu0 0
    %511 = vmatprep.subr.bf16.mxu0 0
    %512 = vmatpush2.bf16.msra.mxu0 0
    %513 = vmatprep.subr.bf16.mxu0 0
    %514 = vmatpush2.bf16.msra.mxu0 0
    %515 = vmatprep.subr.bf16.mxu0 0
    %516 = vmatpush2.bf16.msra.mxu0 0
    %517 = vmatprep.subr.bf16.mxu0 0
    %518 = vmatpush2.bf16.msra.mxu0 0
    %519 = vmatprep.mubr.bf16.mxu0 0
    %520 = vmatmul.mubr.bf16.gmra.mxu0 %v485
    %v521 = vpop.f32.mrf.mxu0
    %v522 = vadd.f32 0.0, %v521
    %v523 = vpop.f32.mrf.mxu0
    %v524 = vpop.f32.mrf.mxu0
    %v525 = vpop.f32.mrf.mxu0
    %526 = vdwg.mxu0
    %v527 = vpack.c.bf16 %v479, %v479
    %529 = vrot.lane.b32.xlu0 %v527, 32
    %v530 = vpop.permute.xlu0 %529
    %v532 = vsel %vm184, %v530, 0
    %534 = vmatprep.subr.bf16.mxu0 0
    %535 = vmatpush1.bf16.msra.mxu0 0
    %536 = vmatprep.subr.bf16.mxu0 0
    %537 = vmatpush1.bf16.msra.mxu0 0
    %538 = vmatprep.subr.bf16.mxu0 0
    %539 = vmatpush1.bf16.msra.mxu0 0
    %540 = vmatprep.subr.bf16.mxu0 0
    %541 = vmatpush1.bf16.msra.mxu0 0
    %542 = vmatprep.subr.bf16.mxu0 0
    %543 = vmatpush1.bf16.msra.mxu0 0
    %544 = vmatprep.subr.bf16.mxu0 0
    %545 = vmatpush1.bf16.msra.mxu0 0
    %546 = vmatprep.subr.bf16.mxu0 0
    %547 = vmatpush1.bf16.msra.mxu0 0
    %548 = vmatprep.subr.bf16.mxu0 0
    %549 = vmatpush1.bf16.msra.mxu0 %v232
    %550 = vmatprep.subr.bf16.mxu0 0
    %551 = vmatpush2.bf16.msra.mxu0 0
    %552 = vmatprep.subr.bf16.mxu0 0
    %553 = vmatpush2.bf16.msra.mxu0 0
    %554 = vmatprep.subr.bf16.mxu0 0
    %555 = vmatpush2.bf16.msra.mxu0 0
    %556 = vmatprep.subr.bf16.mxu0 0
    %557 = vmatpush2.bf16.msra.mxu0 0
    %558 = vmatprep.subr.bf16.mxu0 0
    %559 = vmatpush2.bf16.msra.mxu0 0
    %560 = vmatprep.subr.bf16.mxu0 0
    %561 = vmatpush2.bf16.msra.mxu0 0
    %562 = vmatprep.subr.bf16.mxu0 0
    %563 = vmatpush2.bf16.msra.mxu0 0
    %564 = vmatprep.subr.bf16.mxu0 0
    %565 = vmatpush2.bf16.msra.mxu0 0
    %566 = vmatprep.mubr.bf16.mxu0 0
    %567 = vmatmul.mubr.bf16.gmra.mxu0 %v532
    %v568 = vpop.f32.mrf.mxu0
    %v569 = vadd.f32 0.0, %v568
    %v570 = vpop.f32.mrf.mxu0
    %v571 = vpop.f32.mrf.mxu0
    %v572 = vpop.f32.mrf.mxu0
    %573 = vdwg.mxu0
    %v574 = vld [vmem:[#allocation2 + $0x8] sm:$0xf]
    %v575 = vadd.f32 %v574, %v522
    %v576 = vld [vmem:[#allocation2 + $0x14] sm:$0xf]
    %578 = vrot.lane.b32.xlu0 %v569, 64
    %v579 = vpop.permute.xlu0 %578
    %v581 = vadd.f32 %v576, %v579
    %v582 = vxor.u32 %v575, 2147483648
    %v583 = vmul.f32 %v582, 1.442695
    %v584 = vpow.pop %v583
    %v585 = vadd.f32 %v584, 1.0
    %v586 = vrcp.pop %v585
    %v587 = vmul.f32 1.0, %v586
    %v588 = vtanh.pop %v575
    %v589 = vxor.u32 %v581, 2147483648
    %v590 = vmul.f32 %v589, 1.442695
    %v591 = vpow.pop %v590
    %v592 = vadd.f32 %v591, 1.0
    %v593 = vrcp.pop %v592
    %v594 = vmul.f32 1.0, %v593
    %v595 = vtanh.pop %v581
    %v596 = vmul.f32 %v587, %v456
    %598 = vrot.lane.b32.xlu0 %v588, 80
    %v599 = vpop.permute.xlu0 %598
    %v601 = vmul.f32 %v587, %v599
    %603 = vrot.lane.b32.xlu0 %v601, 16
    %v604 = vpop.permute.xlu0 %603
    %v606 = vadd.f32 %v596, %v604
    %v607 = vmul.f32 %v594, %v467
    %609 = vrot.lane.b32.xlu0 %v595, 80
    %v610 = vpop.permute.xlu0 %609
    %v612 = vmul.f32 %v594, %v610
    %614 = vrot.lane.b32.xlu0 %v612, 16
    %v615 = vpop.permute.xlu0 %614
    %v617 = vadd.f32 %v607, %v615
    %v618 = vtanh.pop %v606
    %620 = vrot.lane.b32.xlu0 %v618, 16
    %v621 = vpop.permute.xlu0 %620
    %v623 = vmul.f32 %v587, %v621
    %v624 = vtanh.pop %v617
    %626 = vrot.lane.b32.xlu0 %v624, 16
    %v627 = vpop.permute.xlu0 %626
    %v629 = vmul.f32 %v594, %v627
    %v630 = vpack.c.bf16 %v623, %v623
    %632 = vrot.lane.b32.xlu0 %v630, 96
    %v633 = vpop.permute.xlu0 %632
    %v635 = vsel %vm184, %v633, 0
    %637 = vmatprep.subr.bf16.mxu0 0
    %638 = vmatpush1.bf16.msra.mxu0 0
    %639 = vmatprep.subr.bf16.mxu0 0
    %640 = vmatpush1.bf16.msra.mxu0 0
    %641 = vmatprep.subr.bf16.mxu0 0
    %642 = vmatpush1.bf16.msra.mxu0 0
    %643 = vmatprep.subr.bf16.mxu0 0
    %644 = vmatpush1.bf16.msra.mxu0 0
    %645 = vmatprep.subr.bf16.mxu0 0
    %646 = vmatpush1.bf16.msra.mxu0 0
    %647 = vmatprep.subr.bf16.mxu0 0
    %648 = vmatpush1.bf16.msra.mxu0 0
    %649 = vmatprep.subr.bf16.mxu0 0
    %650 = vmatpush1.bf16.msra.mxu0 0
    %651 = vmatprep.subr.bf16.mxu0 0
    %652 = vmatpush1.bf16.msra.mxu0 %v182
    %653 = vmatprep.subr.bf16.mxu0 0
    %654 = vmatpush2.bf16.msra.mxu0 0
    %655 = vmatprep.subr.bf16.mxu0 0
    %656 = vmatpush2.bf16.msra.mxu0 0
    %657 = vmatprep.subr.bf16.mxu0 0
    %658 = vmatpush2.bf16.msra.mxu0 0
    %659 = vmatprep.subr.bf16.mxu0 0
    %660 = vmatpush2.bf16.msra.mxu0 0
    %661 = vmatprep.subr.bf16.mxu0 0
    %662 = vmatpush2.bf16.msra.mxu0 0
    %663 = vmatprep.subr.bf16.mxu0 0
    %664 = vmatpush2.bf16.msra.mxu0 0
    %665 = vmatprep.subr.bf16.mxu0 0
    %666 = vmatpush2.bf16.msra.mxu0 0
    %667 = vmatprep.subr.bf16.mxu0 0
    %668 = vmatpush2.bf16.msra.mxu0 0
    %669 = vmatprep.mubr.bf16.mxu0 0
    %670 = vmatmul.mubr.bf16.gmra.mxu0 %v635
    %v671 = vpop.f32.mrf.mxu0
    %v672 = vadd.f32 0.0, %v671
    %v673 = vpop.f32.mrf.mxu0
    %v674 = vpop.f32.mrf.mxu0
    %v675 = vpop.f32.mrf.mxu0
    %676 = vdwg.mxu0
    %v677 = vpack.c.bf16 %v629, %v629
    %679 = vrot.lane.b32.xlu0 %v677, 32
    %v680 = vpop.permute.xlu0 %679
    %v682 = vsel %vm184, %v680, 0
    %684 = vmatprep.subr.bf16.mxu0 0
    %685 = vmatpush1.bf16.msra.mxu0 0
    %686 = vmatprep.subr.bf16.mxu0 0
    %687 = vmatpush1.bf16.msra.mxu0 0
    %688 = vmatprep.subr.bf16.mxu0 0
    %689 = vmatpush1.bf16.msra.mxu0 0
    %690 = vmatprep.subr.bf16.mxu0 0
    %691 = vmatpush1.bf16.msra.mxu0 0
    %692 = vmatprep.subr.bf16.mxu0 0
    %693 = vmatpush1.bf16.msra.mxu0 0
    %694 = vmatprep.subr.bf16.mxu0 0
    %695 = vmatpush1.bf16.msra.mxu0 0
    %696 = vmatprep.subr.bf16.mxu0 0
    %697 = vmatpush1.bf16.msra.mxu0 0
    %698 = vmatprep.subr.bf16.mxu0 0
    %699 = vmatpush1.bf16.msra.mxu0 %v232
    %700 = vmatprep.subr.bf16.mxu0 0
    %701 = vmatpush2.bf16.msra.mxu0 0
    %702 = vmatprep.subr.bf16.mxu0 0
    %703 = vmatpush2.bf16.msra.mxu0 0
    %704 = vmatprep.subr.bf16.mxu0 0
    %705 = vmatpush2.bf16.msra.mxu0 0
    %706 = vmatprep.subr.bf16.mxu0 0
    %707 = vmatpush2.bf16.msra.mxu0 0
    %708 = vmatprep.subr.bf16.mxu0 0
    %709 = vmatpush2.bf16.msra.mxu0 0
    %710 = vmatprep.subr.bf16.mxu0 0
    %711 = vmatpush2.bf16.msra.mxu0 0
    %712 = vmatprep.subr.bf16.mxu0 0
    %713 = vmatpush2.bf16.msra.mxu0 0
    %714 = vmatprep.subr.bf16.mxu0 0
    %715 = vmatpush2.bf16.msra.mxu0 0
    %716 = vmatprep.mubr.bf16.mxu0 0
    %717 = vmatmul.mubr.bf16.gmra.mxu0 %v682
    %v718 = vpop.f32.mrf.mxu0
    %v719 = vadd.f32 0.0, %v718
    %v720 = vpop.f32.mrf.mxu0
    %v721 = vpop.f32.mrf.mxu0
    %v722 = vpop.f32.mrf.mxu0
    %723 = vdwg.mxu0
    %v724 = vld [vmem:[#allocation2 + $0xc] sm:$0xf]
    %v725 = vadd.f32 %v724, %v672
    %v726 = vld [vmem:[#allocation2 + $0x10] sm:$0xf]
    %728 = vrot.lane.b32.xlu0 %v719, 64
    %v729 = vpop.permute.xlu0 %728
    %v731 = vadd.f32 %v726, %v729
    %v732 = vxor.u32 %v725, 2147483648
    %v733 = vmul.f32 %v732, 1.442695
    %v734 = vpow.pop %v733
    %v735 = vadd.f32 %v734, 1.0
    %v736 = vrcp.pop %v735
    %v737 = vmul.f32 1.0, %v736
    %v738 = vtanh.pop %v725
    %v739 = vxor.u32 %v731, 2147483648
    %v740 = vmul.f32 %v739, 1.442695
    %v741 = vpow.pop %v740
    %v742 = vadd.f32 %v741, 1.0
    %v743 = vrcp.pop %v742
    %v744 = vmul.f32 1.0, %v743
    %v745 = vtanh.pop %v731
    %v746 = vmul.f32 %v737, %v606
    %748 = vrot.lane.b32.xlu0 %v738, 80
    %v749 = vpop.permute.xlu0 %748
    %v751 = vmul.f32 %v737, %v749
    %753 = vrot.lane.b32.xlu0 %v751, 16
    %v754 = vpop.permute.xlu0 %753
    %v756 = vadd.f32 %v746, %v754
    %v757 = vmul.f32 %v744, %v617
    %759 = vrot.lane.b32.xlu0 %v745, 80
    %v760 = vpop.permute.xlu0 %759
    %v762 = vmul.f32 %v744, %v760
    %764 = vrot.lane.b32.xlu0 %v762, 16
    %v765 = vpop.permute.xlu0 %764
    %v767 = vadd.f32 %v757, %v765
    %v768 = vtanh.pop %v756
    %770 = vrot.lane.b32.xlu0 %v768, 16
    %v771 = vpop.permute.xlu0 %770
    %v773 = vmul.f32 %v737, %v771
    %v774 = vtanh.pop %v767
    %776 = vrot.lane.b32.xlu0 %v774, 16
    %v777 = vpop.permute.xlu0 %776
    %v779 = vmul.f32 %v744, %v777
    %v780 = vpack.c.bf16 %v773, %v773
    %782 = vrot.lane.b32.xlu0 %v780, 96
    %v783 = vpop.permute.xlu0 %782
    %v785 = vsel %vm184, %v783, 0
    %787 = vmatprep.subr.bf16.mxu0 0
    %788 = vmatpush1.bf16.msra.mxu0 0
    %789 = vmatprep.subr.bf16.mxu0 0
    %790 = vmatpush1.bf16.msra.mxu0 0
    %791 = vmatprep.subr.bf16.mxu0 0
    %792 = vmatpush1.bf16.msra.mxu0 0
    %793 = vmatprep.subr.bf16.mxu0 0
    %794 = vmatpush1.bf16.msra.mxu0 0
    %795 = vmatprep.subr.bf16.mxu0 0
    %796 = vmatpush1.bf16.msra.mxu0 0
    %797 = vmatprep.subr.bf16.mxu0 0
    %798 = vmatpush1.bf16.msra.mxu0 0
    %799 = vmatprep.subr.bf16.mxu0 0
    %800 = vmatpush1.bf16.msra.mxu0 0
    %801 = vmatprep.subr.bf16.mxu0 0
    %802 = vmatpush1.bf16.msra.mxu0 %v182
    %803 = vmatprep.subr.bf16.mxu0 0
    %804 = vmatpush2.bf16.msra.mxu0 0
    %805 = vmatprep.subr.bf16.mxu0 0
    %806 = vmatpush2.bf16.msra.mxu0 0
    %807 = vmatprep.subr.bf16.mxu0 0
    %808 = vmatpush2.bf16.msra.mxu0 0
    %809 = vmatprep.subr.bf16.mxu0 0
    %810 = vmatpush2.bf16.msra.mxu0 0
    %811 = vmatprep.subr.bf16.mxu0 0
    %812 = vmatpush2.bf16.msra.mxu0 0
    %813 = vmatprep.subr.bf16.mxu0 0
    %814 = vmatpush2.bf16.msra.mxu0 0
    %815 = vmatprep.subr.bf16.mxu0 0
    %816 = vmatpush2.bf16.msra.mxu0 0
    %817 = vmatprep.subr.bf16.mxu0 0
    %818 = vmatpush2.bf16.msra.mxu0 0
    %819 = vmatprep.mubr.bf16.mxu0 0
    %820 = vmatmul.mubr.bf16.gmra.mxu0 %v785
    %v821 = vpop.f32.mrf.mxu0
    %v822 = vadd.f32 0.0, %v821
    %v823 = vpop.f32.mrf.mxu0
    %v824 = vpop.f32.mrf.mxu0
    %v825 = vpop.f32.mrf.mxu0
    %826 = vdwg.mxu0
    %v827 = vpack.c.bf16 %v779, %v779
    %829 = vrot.lane.b32.xlu0 %v827, 32
    %v830 = vpop.permute.xlu0 %829
    %v832 = vsel %vm184, %v830, 0
    %834 = vmatprep.subr.bf16.mxu0 0
    %835 = vmatpush1.bf16.msra.mxu0 0
    %836 = vmatprep.subr.bf16.mxu0 0
    %837 = vmatpush1.bf16.msra.mxu0 0
    %838 = vmatprep.subr.bf16.mxu0 0
    %839 = vmatpush1.bf16.msra.mxu0 0
    %840 = vmatprep.subr.bf16.mxu0 0
    %841 = vmatpush1.bf16.msra.mxu0 0
    %842 = vmatprep.subr.bf16.mxu0 0
    %843 = vmatpush1.bf16.msra.mxu0 0
    %844 = vmatprep.subr.bf16.mxu0 0
    %845 = vmatpush1.bf16.msra.mxu0 0
    %846 = vmatprep.subr.bf16.mxu0 0
    %847 = vmatpush1.bf16.msra.mxu0 0
    %848 = vmatprep.subr.bf16.mxu0 0
    %849 = vmatpush1.bf16.msra.mxu0 %v232
    %850 = vmatprep.subr.bf16.mxu0 0
    %851 = vmatpush2.bf16.msra.mxu0 0
    %852 = vmatprep.subr.bf16.mxu0 0
    %853 = vmatpush2.bf16.msra.mxu0 0
    %854 = vmatprep.subr.bf16.mxu0 0
    %855 = vmatpush2.bf16.msra.mxu0 0
    %856 = vmatprep.subr.bf16.mxu0 0
    %857 = vmatpush2.bf16.msra.mxu0 0
    %858 = vmatprep.subr.bf16.mxu0 0
    %859 = vmatpush2.bf16.msra.mxu0 0
    %860 = vmatprep.subr.bf16.mxu0 0
    %861 = vmatpush2.bf16.msra.mxu0 0
    %862 = vmatprep.subr.bf16.mxu0 0
    %863 = vmatpush2.bf16.msra.mxu0 0
    %864 = vmatprep.subr.bf16.mxu0 0
    %865 = vmatpush2.bf16.msra.mxu0 0
    %866 = vmatprep.mubr.bf16.mxu0 0
    %867 = vmatmul.mubr.bf16.gmra.mxu0 %v832
    %v868 = vpop.f32.mrf.mxu0
    %v869 = vadd.f32 0.0, %v868
    %v870 = vpop.f32.mrf.mxu0
    %v871 = vpop.f32.mrf.mxu0
    %v872 = vpop.f32.mrf.mxu0
    %873 = vdwg.mxu0
    %v874 = vadd.f32 %v726, %v822
    %876 = vrot.lane.b32.xlu0 %v869, 64
    %v877 = vpop.permute.xlu0 %876
    %v879 = vadd.f32 %v724, %v877
    %v880 = vxor.u32 %v874, 2147483648
    %v881 = vmul.f32 %v880, 1.442695
    %v882 = vpow.pop %v881
    %v883 = vadd.f32 %v882, 1.0
    %v884 = vrcp.pop %v883
    %v885 = vmul.f32 1.0, %v884
    %v886 = vtanh.pop %v874
    %v887 = vxor.u32 %v879, 2147483648
    %v888 = vmul.f32 %v887, 1.442695
    %v889 = vpow.pop %v888
    %v890 = vadd.f32 %v889, 1.0
    %v891 = vrcp.pop %v890
    %v892 = vmul.f32 1.0, %v891
    %v893 = vtanh.pop %v879
    %v894 = vmul.f32 %v885, %v756
    %896 = vrot.lane.b32.xlu0 %v886, 80
    %v897 = vpop.permute.xlu0 %896
    %v899 = vmul.f32 %v885, %v897
    %901 = vrot.lane.b32.xlu0 %v899, 16
    %v902 = vpop.permute.xlu0 %901
    %v904 = vadd.f32 %v894, %v902
    %v905 = vmul.f32 %v892, %v767
    %907 = vrot.lane.b32.xlu0 %v893, 80
    %v908 = vpop.permute.xlu0 %907
    %v910 = vmul.f32 %v892, %v908
    %912 = vrot.lane.b32.xlu0 %v910, 16
    %v913 = vpop.permute.xlu0 %912
    %v915 = vadd.f32 %v905, %v913
    %v916 = vtanh.pop %v904
    %918 = vrot.lane.b32.xlu0 %v916, 16
    %v919 = vpop.permute.xlu0 %918
    %v921 = vmul.f32 %v885, %v919
    %v922 = vtanh.pop %v915
    %924 = vrot.lane.b32.xlu0 %v922, 16
    %v925 = vpop.permute.xlu0 %924
    %v927 = vmul.f32 %v892, %v925
    %v928 = vpack.c.bf16 %v921, %v921
    %930 = vrot.lane.b32.xlu0 %v928, 96
    %v931 = vpop.permute.xlu0 %930
    %v933 = vsel %vm184, %v931, 0
    %935 = vmatprep.subr.bf16.mxu0 0
    %936 = vmatpush1.bf16.msra.mxu0 0
    %937 = vmatprep.subr.bf16.mxu0 0
    %938 = vmatpush1.bf16.msra.mxu0 0
    %939 = vmatprep.subr.bf16.mxu0 0
    %940 = vmatpush1.bf16.msra.mxu0 0
    %941 = vmatprep.subr.bf16.mxu0 0
    %942 = vmatpush1.bf16.msra.mxu0 0
    %943 = vmatprep.subr.bf16.mxu0 0
    %944 = vmatpush1.bf16.msra.mxu0 0
    %945 = vmatprep.subr.bf16.mxu0 0
    %946 = vmatpush1.bf16.msra.mxu0 0
    %947 = vmatprep.subr.bf16.mxu0 0
    %948 = vmatpush1.bf16.msra.mxu0 0
    %949 = vmatprep.subr.bf16.mxu0 0
    %950 = vmatpush1.bf16.msra.mxu0 %v182
    %951 = vmatprep.subr.bf16.mxu0 0
    %952 = vmatpush2.bf16.msra.mxu0 0
    %953 = vmatprep.subr.bf16.mxu0 0
    %954 = vmatpush2.bf16.msra.mxu0 0
    %955 = vmatprep.subr.bf16.mxu0 0
    %956 = vmatpush2.bf16.msra.mxu0 0
    %957 = vmatprep.subr.bf16.mxu0 0
    %958 = vmatpush2.bf16.msra.mxu0 0
    %959 = vmatprep.subr.bf16.mxu0 0
    %960 = vmatpush2.bf16.msra.mxu0 0
    %961 = vmatprep.subr.bf16.mxu0 0
    %962 = vmatpush2.bf16.msra.mxu0 0
    %963 = vmatprep.subr.bf16.mxu0 0
    %964 = vmatpush2.bf16.msra.mxu0 0
    %965 = vmatprep.subr.bf16.mxu0 0
    %966 = vmatpush2.bf16.msra.mxu0 0
    %967 = vmatprep.mubr.bf16.mxu0 0
    %968 = vmatmul.mubr.bf16.gmra.mxu0 %v933
    %v969 = vpop.f32.mrf.mxu0
    %v970 = vadd.f32 0.0, %v969
    %v971 = vpop.f32.mrf.mxu0
    %v972 = vpop.f32.mrf.mxu0
    %v973 = vpop.f32.mrf.mxu0
    %974 = vdwg.mxu0
    %v975 = vpack.c.bf16 %v927, %v927
    %977 = vrot.lane.b32.xlu0 %v975, 32
    %v978 = vpop.permute.xlu0 %977
    %v980 = vsel %vm184, %v978, 0
    %982 = vmatprep.subr.bf16.mxu0 0
    %983 = vmatpush1.bf16.msra.mxu0 0
    %984 = vmatprep.subr.bf16.mxu0 0
    %985 = vmatpush1.bf16.msra.mxu0 0
    %986 = vmatprep.subr.bf16.mxu0 0
    %987 = vmatpush1.bf16.msra.mxu0 0
    %988 = vmatprep.subr.bf16.mxu0 0
    %989 = vmatpush1.bf16.msra.mxu0 0
    %990 = vmatprep.subr.bf16.mxu0 0
    %991 = vmatpush1.bf16.msra.mxu0 0
    %992 = vmatprep.subr.bf16.mxu0 0
    %993 = vmatpush1.bf16.msra.mxu0 0
    %994 = vmatprep.subr.bf16.mxu0 0
    %995 = vmatpush1.bf16.msra.mxu0 0
    %996 = vmatprep.subr.bf16.mxu0 0
    %997 = vmatpush1.bf16.msra.mxu0 %v232
    %998 = vmatprep.subr.bf16.mxu0 0
    %999 = vmatpush2.bf16.msra.mxu0 0
    %1000 = vmatprep.subr.bf16.mxu0 0
    %1001 = vmatpush2.bf16.msra.mxu0 0
    %1002 = vmatprep.subr.bf16.mxu0 0
    %1003 = vmatpush2.bf16.msra.mxu0 0
    %1004 = vmatprep.subr.bf16.mxu0 0
    %1005 = vmatpush2.bf16.msra.mxu0 0
    %1006 = vmatprep.subr.bf16.mxu0 0
    %1007 = vmatpush2.bf16.msra.mxu0 0
    %1008 = vmatprep.subr.bf16.mxu0 0
    %1009 = vmatpush2.bf16.msra.mxu0 0
    %1010 = vmatprep.subr.bf16.mxu0 0
    %1011 = vmatpush2.bf16.msra.mxu0 0
    %1012 = vmatprep.subr.bf16.mxu0 0
    %1013 = vmatpush2.bf16.msra.mxu0 0
    %1014 = vmatprep.mubr.bf16.mxu0 0
    %1015 = vmatmul.mubr.bf16.gmra.mxu0 %v980
    %v1016 = vpop.f32.mrf.mxu0
    %v1017 = vadd.f32 0.0, %v1016
    %v1018 = vpop.f32.mrf.mxu0
    %v1019 = vpop.f32.mrf.mxu0
    %v1020 = vpop.f32.mrf.mxu0
    %1021 = vdwg.mxu0
    %v1022 = vadd.f32 %v576, %v970
    %1024 = vrot.lane.b32.xlu0 %v1017, 64
    %v1025 = vpop.permute.xlu0 %1024
    %v1027 = vadd.f32 %v574, %v1025
    %v1028 = vxor.u32 %v1022, 2147483648
    %v1029 = vmul.f32 %v1028, 1.442695
    %v1030 = vpow.pop %v1029
    %v1031 = vadd.f32 %v1030, 1.0
    %v1032 = vrcp.pop %v1031
    %v1033 = vmul.f32 1.0, %v1032
    %v1034 = vtanh.pop %v1022
    %v1035 = vxor.u32 %v1027, 2147483648
    %v1036 = vmul.f32 %v1035, 1.442695
    %v1037 = vpow.pop %v1036
    %v1038 = vadd.f32 %v1037, 1.0
    %v1039 = vrcp.pop %v1038
    %v1040 = vmul.f32 1.0, %v1039
    %v1041 = vtanh.pop %v1027
    %v1042 = vmul.f32 %v1033, %v904
    %1044 = vrot.lane.b32.xlu0 %v1034, 80
    %v1045 = vpop.permute.xlu0 %1044
    %v1047 = vmul.f32 %v1033, %v1045
    %1049 = vrot.lane.b32.xlu0 %v1047, 16
    %v1050 = vpop.permute.xlu0 %1049
    %v1052 = vadd.f32 %v1042, %v1050
    %v1053 = vmul.f32 %v1040, %v915
    %1055 = vrot.lane.b32.xlu0 %v1041, 80
    %v1056 = vpop.permute.xlu0 %1055
    %v1058 = vmul.f32 %v1040, %v1056
    %1060 = vrot.lane.b32.xlu0 %v1058, 16
    %v1061 = vpop.permute.xlu0 %1060
    %v1063 = vadd.f32 %v1053, %v1061
    %v1064 = vtanh.pop %v1052
    %1066 = vrot.lane.b32.xlu0 %v1064, 16
    %v1067 = vpop.permute.xlu0 %1066
    %v1069 = vmul.f32 %v1033, %v1067
    %v1070 = vtanh.pop %v1063
    %1072 = vrot.lane.b32.xlu0 %v1070, 16
    %v1073 = vpop.permute.xlu0 %1072
    %v1075 = vmul.f32 %v1040, %v1073
    %v1076 = vpack.c.bf16 %v1069, %v1069
    %1078 = vrot.lane.b32.xlu0 %v1076, 96
    %v1079 = vpop.permute.xlu0 %1078
    %v1081 = vsel %vm184, %v1079, 0
    %1083 = vmatprep.subr.bf16.mxu0 0
    %1084 = vmatpush1.bf16.msra.mxu0 0
    %1085 = vmatprep.subr.bf16.mxu0 0
    %1086 = vmatpush1.bf16.msra.mxu0 0
    %1087 = vmatprep.subr.bf16.mxu0 0
    %1088 = vmatpush1.bf16.msra.mxu0 0
    %1089 = vmatprep.subr.bf16.mxu0 0
    %1090 = vmatpush1.bf16.msra.mxu0 0
    %1091 = vmatprep.subr.bf16.mxu0 0
    %1092 = vmatpush1.bf16.msra.mxu0 0
    %1093 = vmatprep.subr.bf16.mxu0 0
    %1094 = vmatpush1.bf16.msra.mxu0 0
    %1095 = vmatprep.subr.bf16.mxu0 0
    %1096 = vmatpush1.bf16.msra.mxu0 0
    %1097 = vmatprep.subr.bf16.mxu0 0
    %1098 = vmatpush1.bf16.msra.mxu0 %v182
    %1099 = vmatprep.subr.bf16.mxu0 0
    %1100 = vmatpush2.bf16.msra.mxu0 0
    %1101 = vmatprep.subr.bf16.mxu0 0
    %1102 = vmatpush2.bf16.msra.mxu0 0
    %1103 = vmatprep.subr.bf16.mxu0 0
    %1104 = vmatpush2.bf16.msra.mxu0 0
    %1105 = vmatprep.subr.bf16.mxu0 0
    %1106 = vmatpush2.bf16.msra.mxu0 0
    %1107 = vmatprep.subr.bf16.mxu0 0
    %1108 = vmatpush2.bf16.msra.mxu0 0
    %1109 = vmatprep.subr.bf16.mxu0 0
    %1110 = vmatpush2.bf16.msra.mxu0 0
    %1111 = vmatprep.subr.bf16.mxu0 0
    %1112 = vmatpush2.bf16.msra.mxu0 0
    %1113 = vmatprep.subr.bf16.mxu0 0
    %1114 = vmatpush2.bf16.msra.mxu0 0
    %1115 = vmatprep.mubr.bf16.mxu0 0
    %1116 = vmatmul.mubr.bf16.gmra.mxu0 %v1081
    %v1117 = vpop.f32.mrf.mxu0
    %v1118 = vadd.f32 0.0, %v1117
    %v1119 = vpop.f32.mrf.mxu0
    %v1120 = vpop.f32.mrf.mxu0
    %v1121 = vpop.f32.mrf.mxu0
    %1122 = vdwg.mxu0
    %v1123 = vpack.c.bf16 %v1075, %v1075
    %1125 = vrot.lane.b32.xlu0 %v1123, 32
    %v1126 = vpop.permute.xlu0 %1125
    %v1128 = vsel %vm184, %v1126, 0
    %1130 = vmatprep.subr.bf16.mxu0 0
    %1131 = vmatpush1.bf16.msra.mxu0 0
    %1132 = vmatprep.subr.bf16.mxu0 0
    %1133 = vmatpush1.bf16.msra.mxu0 0
    %1134 = vmatprep.subr.bf16.mxu0 0
    %1135 = vmatpush1.bf16.msra.mxu0 0
    %1136 = vmatprep.subr.bf16.mxu0 0
    %1137 = vmatpush1.bf16.msra.mxu0 0
    %1138 = vmatprep.subr.bf16.mxu0 0
    %1139 = vmatpush1.bf16.msra.mxu0 0
    %1140 = vmatprep.subr.bf16.mxu0 0
    %1141 = vmatpush1.bf16.msra.mxu0 0
    %1142 = vmatprep.subr.bf16.mxu0 0
    %1143 = vmatpush1.bf16.msra.mxu0 0
    %1144 = vmatprep.subr.bf16.mxu0 0
    %1145 = vmatpush1.bf16.msra.mxu0 %v232
    %1146 = vmatprep.subr.bf16.mxu0 0
    %1147 = vmatpush2.bf16.msra.mxu0 0
    %1148 = vmatprep.subr.bf16.mxu0 0
    %1149 = vmatpush2.bf16.msra.mxu0 0
    %1150 = vmatprep.subr.bf16.mxu0 0
    %1151 = vmatpush2.bf16.msra.mxu0 0
    %1152 = vmatprep.subr.bf16.mxu0 0
    %1153 = vmatpush2.bf16.msra.mxu0 0
    %1154 = vmatprep.subr.bf16.mxu0 0
    %1155 = vmatpush2.bf16.msra.mxu0 0
    %1156 = vmatprep.subr.bf16.mxu0 0
    %1157 = vmatpush2.bf16.msra.mxu0 0
    %1158 = vmatprep.subr.bf16.mxu0 0
    %1159 = vmatpush2.bf16.msra.mxu0 0
    %1160 = vmatprep.subr.bf16.mxu0 0
    %1161 = vmatpush2.bf16.msra.mxu0 0
    %1162 = vmatprep.mubr.bf16.mxu0 0
    %1163 = vmatmul.mubr.bf16.gmra.mxu0 %v1128
    %v1164 = vpop.f32.mrf.mxu0
    %v1165 = vadd.f32 0.0, %v1164
    %v1166 = vpop.f32.mrf.mxu0
    %v1167 = vpop.f32.mrf.mxu0
    %v1168 = vpop.f32.mrf.mxu0
    %1169 = vdwg.mxu0
    %v1170 = vadd.f32 %v426, %v1118
    %1172 = vrot.lane.b32.xlu0 %v1165, 64
    %v1173 = vpop.permute.xlu0 %1172
    %v1175 = vadd.f32 %v424, %v1173
    %v1176 = vxor.u32 %v1170, 2147483648
    %v1177 = vmul.f32 %v1176, 1.442695
    %v1178 = vpow.pop %v1177
    %v1179 = vadd.f32 %v1178, 1.0
    %v1180 = vrcp.pop %v1179
    %v1181 = vmul.f32 1.0, %v1180
    %v1182 = vtanh.pop %v1170
    %v1183 = vxor.u32 %v1175, 2147483648
    %v1184 = vmul.f32 %v1183, 1.442695
    %v1185 = vpow.pop %v1184
    %v1186 = vadd.f32 %v1185, 1.0
    %v1187 = vrcp.pop %v1186
    %v1188 = vmul.f32 1.0, %v1187
    %v1189 = vtanh.pop %v1175
    %v1190 = vmul.f32 %v1181, %v1052
    %1192 = vrot.lane.b32.xlu0 %v1182, 80
    %v1193 = vpop.permute.xlu0 %1192
    %v1195 = vmul.f32 %v1181, %v1193
    %1197 = vrot.lane.b32.xlu0 %v1195, 16
    %v1198 = vpop.permute.xlu0 %1197
    %v1200 = vadd.f32 %v1190, %v1198
    %v1201 = vmul.f32 %v1188, %v1063
    %1203 = vrot.lane.b32.xlu0 %v1189, 80
    %v1204 = vpop.permute.xlu0 %1203
    %v1206 = vmul.f32 %v1188, %v1204
    %1208 = vrot.lane.b32.xlu0 %v1206, 16
    %v1209 = vpop.permute.xlu0 %1208
    %v1211 = vadd.f32 %v1201, %v1209
    %v1212 = vtanh.pop %v1200
    %1214 = vrot.lane.b32.xlu0 %v1212, 16
    %v1215 = vpop.permute.xlu0 %1214
    %v1217 = vmul.f32 %v1181, %v1215
    %v1218 = vtanh.pop %v1211
    %1220 = vrot.lane.b32.xlu0 %v1218, 16
    %v1221 = vpop.permute.xlu0 %1220
    %v1223 = vmul.f32 %v1188, %v1221
    %v1224 = vpack.c.bf16 %v1217, %v1217
    %1226 = vrot.lane.b32.xlu0 %v1224, 96
    %v1227 = vpop.permute.xlu0 %1226
    %v1229 = vsel %vm184, %v1227, 0
    %1231 = vmatprep.subr.bf16.mxu0 0
    %1232 = vmatpush1.bf16.msra.mxu0 0
    %1233 = vmatprep.subr.bf16.mxu0 0
    %1234 = vmatpush1.bf16.msra.mxu0 0
    %1235 = vmatprep.subr.bf16.mxu0 0
    %1236 = vmatpush1.bf16.msra.mxu0 0
    %1237 = vmatprep.subr.bf16.mxu0 0
    %1238 = vmatpush1.bf16.msra.mxu0 0
    %1239 = vmatprep.subr.bf16.mxu0 0
    %1240 = vmatpush1.bf16.msra.mxu0 0
    %1241 = vmatprep.subr.bf16.mxu0 0
    %1242 = vmatpush1.bf16.msra.mxu0 0
    %1243 = vmatprep.subr.bf16.mxu0 0
    %1244 = vmatpush1.bf16.msra.mxu0 0
    %1245 = vmatprep.subr.bf16.mxu0 0
    %1246 = vmatpush1.bf16.msra.mxu0 %v182
    %1247 = vmatprep.subr.bf16.mxu0 0
    %1248 = vmatpush2.bf16.msra.mxu0 0
    %1249 = vmatprep.subr.bf16.mxu0 0
    %1250 = vmatpush2.bf16.msra.mxu0 0
    %1251 = vmatprep.subr.bf16.mxu0 0
    %1252 = vmatpush2.bf16.msra.mxu0 0
    %1253 = vmatprep.subr.bf16.mxu0 0
    %1254 = vmatpush2.bf16.msra.mxu0 0
    %1255 = vmatprep.subr.bf16.mxu0 0
    %1256 = vmatpush2.bf16.msra.mxu0 0
    %1257 = vmatprep.subr.bf16.mxu0 0
    %1258 = vmatpush2.bf16.msra.mxu0 0
    %1259 = vmatprep.subr.bf16.mxu0 0
    %1260 = vmatpush2.bf16.msra.mxu0 0
    %1261 = vmatprep.subr.bf16.mxu0 0
    %1262 = vmatpush2.bf16.msra.mxu0 0
    %1263 = vmatprep.mubr.bf16.mxu0 0
    %1264 = vmatmul.mubr.bf16.gmra.mxu0 %v1229
    %v1265 = vpop.f32.mrf.mxu0
    %v1266 = vadd.f32 0.0, %v1265
    %v1267 = vpop.f32.mrf.mxu0
    %v1268 = vpop.f32.mrf.mxu0
    %v1269 = vpop.f32.mrf.mxu0
    %1270 = vdwg.mxu0
    %v1271 = vpack.c.bf16 %v1223, %v1223
    %1273 = vrot.lane.b32.xlu0 %v1271, 32
    %v1274 = vpop.permute.xlu0 %1273
    %v1276 = vsel %vm184, %v1274, 0
    %1278 = vmatprep.subr.bf16.mxu0 0
    %1279 = vmatpush1.bf16.msra.mxu0 0
    %1280 = vmatprep.subr.bf16.mxu0 0
    %1281 = vmatpush1.bf16.msra.mxu0 0
    %1282 = vmatprep.subr.bf16.mxu0 0
    %1283 = vmatpush1.bf16.msra.mxu0 0
    %1284 = vmatprep.subr.bf16.mxu0 0
    %1285 = vmatpush1.bf16.msra.mxu0 0
    %1286 = vmatprep.subr.bf16.mxu0 0
    %1287 = vmatpush1.bf16.msra.mxu0 0
    %1288 = vmatprep.subr.bf16.mxu0 0
    %1289 = vmatpush1.bf16.msra.mxu0 0
    %1290 = vmatprep.subr.bf16.mxu0 0
    %1291 = vmatpush1.bf16.msra.mxu0 0
    %1292 = vmatprep.subr.bf16.mxu0 0
    %1293 = vmatpush1.bf16.msra.mxu0 %v232
    %1294 = vmatprep.subr.bf16.mxu0 0
    %1295 = vmatpush2.bf16.msra.mxu0 0
    %1296 = vmatprep.subr.bf16.mxu0 0
    %1297 = vmatpush2.bf16.msra.mxu0 0
    %1298 = vmatprep.subr.bf16.mxu0 0
    %1299 = vmatpush2.bf16.msra.mxu0 0
    %1300 = vmatprep.subr.bf16.mxu0 0
    %1301 = vmatpush2.bf16.msra.mxu0 0
    %1302 = vmatprep.subr.bf16.mxu0 0
    %1303 = vmatpush2.bf16.msra.mxu0 0
    %1304 = vmatprep.subr.bf16.mxu0 0
    %1305 = vmatpush2.bf16.msra.mxu0 0
    %1306 = vmatprep.subr.bf16.mxu0 0
    %1307 = vmatpush2.bf16.msra.mxu0 0
    %1308 = vmatprep.subr.bf16.mxu0 0
    %1309 = vmatpush2.bf16.msra.mxu0 0
    %1310 = vmatprep.mubr.bf16.mxu0 0
    %1311 = vmatmul.mubr.bf16.gmra.mxu0 %v1276
    %v1312 = vpop.f32.mrf.mxu0
    %v1313 = vadd.f32 0.0, %v1312
    %v1314 = vpop.f32.mrf.mxu0
    %v1315 = vpop.f32.mrf.mxu0
    %v1316 = vpop.f32.mrf.mxu0
    %1317 = vdwg.mxu0
    %v1318 = vadd.f32 %v276, %v1266
    %1320 = vrot.lane.b32.xlu0 %v1313, 64
    %v1321 = vpop.permute.xlu0 %1320
    %v1323 = vadd.f32 %v274, %v1321
    %v1324 = vxor.u32 %v1318, 2147483648
    %v1325 = vmul.f32 %v1324, 1.442695
    %v1326 = vpow.pop %v1325
    %v1327 = vadd.f32 %v1326, 1.0
    %v1328 = vrcp.pop %v1327
    %v1329 = vmul.f32 1.0, %v1328
    %v1330 = vtanh.pop %v1318
    %v1331 = vxor.u32 %v1323, 2147483648
    %v1332 = vmul.f32 %v1331, 1.442695
    %v1333 = vpow.pop %v1332
    %v1334 = vadd.f32 %v1333, 1.0
    %v1335 = vrcp.pop %v1334
    %v1336 = vmul.f32 1.0, %v1335
    %v1337 = vtanh.pop %v1323
    %v1338 = vmul.f32 %v1329, %v1200
    %1340 = vrot.lane.b32.xlu0 %v1330, 80
    %v1341 = vpop.permute.xlu0 %1340
    %v1343 = vmul.f32 %v1329, %v1341
    %1345 = vrot.lane.b32.xlu0 %v1343, 16
    %v1346 = vpop.permute.xlu0 %1345
    %v1348 = vadd.f32 %v1338, %v1346
    %v1349 = vmul.f32 %v1336, %v1211
    %1351 = vrot.lane.b32.xlu0 %v1337, 80
    %v1352 = vpop.permute.xlu0 %1351
    %v1354 = vmul.f32 %v1336, %v1352
    %1356 = vrot.lane.b32.xlu0 %v1354, 16
    %v1357 = vpop.permute.xlu0 %1356
    %v1359 = vadd.f32 %v1349, %v1357
    %v1360 = vtanh.pop %v1348
    %1362 = vrot.lane.b32.xlu0 %v1360, 16
    %v1363 = vpop.permute.xlu0 %1362
    %v1365 = vmul.f32 %v1329, %v1363
    %v1366 = vtanh.pop %v1359
    %1368 = vrot.lane.b32.xlu0 %v1366, 16
    %v1369 = vpop.permute.xlu0 %1368
    %v1371 = vmul.f32 %v1336, %v1369
    %1380 = vrot.lane.b32.xlu0 %v323, 96
    %v1381 = vpop.permute.xlu0 %1380
    %1382 = vrot.lane.b32.xlu0 %v473, 96
    %v1383 = vpop.permute.xlu0 %1382
    %1384 = vrot.lane.b32.xlu0 %v623, 96
    %v1385 = vpop.permute.xlu0 %1384
    %1386 = vrot.lane.b32.xlu0 %v773, 96
    %v1387 = vpop.permute.xlu0 %1386
    %1388 = vrot.lane.b32.xlu0 %v921, 96
    %v1389 = vpop.permute.xlu0 %1388
    %1390 = vrot.lane.b32.xlu0 %v1069, 96
    %v1391 = vpop.permute.xlu0 %1390
    %1392 = vrot.lane.b32.xlu0 %v1217, 96
    %v1393 = vpop.permute.xlu0 %1392
    %1394 = vrot.lane.b32.xlu0 %v1365, 96
    %v1395 = vpop.permute.xlu0 %1394
    %1412 = vrot.lane.b32.xlu0 %v1371, 48
    %v1413 = vpop.permute.xlu0 %1412
    %1414 = vrot.lane.b32.xlu0 %v1223, 48
    %v1415 = vpop.permute.xlu0 %1414
    %1416 = vrot.lane.b32.xlu0 %v1075, 48
    %v1417 = vpop.permute.xlu0 %1416
    %1418 = vrot.lane.b32.xlu0 %v927, 48
    %v1419 = vpop.permute.xlu0 %1418
    %1420 = vrot.lane.b32.xlu0 %v779, 48
    %v1421 = vpop.permute.xlu0 %1420
    %1422 = vrot.lane.b32.xlu0 %v629, 48
    %v1423 = vpop.permute.xlu0 %1422
    %1424 = vrot.lane.b32.xlu0 %v479, 48
    %v1425 = vpop.permute.xlu0 %1424
    %1426 = vrot.lane.b32.xlu0 %v329, 48
    %v1427 = vpop.permute.xlu0 %1426
    %v1436 = vsel %vm184, %v1381, %v1413
    %v1437 = vsel %vm184, %v1383, %v1415
    %v1438 = vsel %vm184, %v1385, %v1417
    %v1439 = vsel %vm184, %v1387, %v1419
    %v1440 = vsel %vm184, %v1389, %v1421
    %v1441 = vsel %vm184, %v1391, %v1423
    %v1442 = vsel %vm184, %v1393, %v1425
    %v1443 = vsel %vm184, %v1395, %v1427
    %v1444 = vpack.c.bf16 %v1436, %v1436
    %v1445 = vpack.c.bf16 %v1437, %v1437
    %v1446 = vpack.c.bf16 %v1438, %v1438
    %v1447 = vpack.c.bf16 %v1439, %v1439
    %v1448 = vpack.c.bf16 %v1440, %v1440
    %v1449 = vpack.c.bf16 %v1441, %v1441
    %v1450 = vpack.c.bf16 %v1442, %v1442
    %v1451 = vpack.c.bf16 %v1443, %v1443
    %vm1452 = vcmask 254976
    %1453 = vst.msk [vmem:[#allocation11] sm:$0x3] %vm1452, %v1444
    %1454 = vst.msk [vmem:[#allocation11 + $0x2] sm:$0x3] %vm1452, %v1445
    %1455 = vst.msk [vmem:[#allocation11 + $0x4] sm:$0x3] %vm1452, %v1446
    %1456 = vst.msk [vmem:[#allocation11 + $0x6] sm:$0x3] %vm1452, %v1447
    %1457 = vst.msk [vmem:[#allocation11 + $0x8] sm:$0x3] %vm1452, %v1448
    %1458 = vst.msk [vmem:[#allocation11 + $0xa] sm:$0x3] %vm1452, %v1449
    %1459 = vst.msk [vmem:[#allocation11 + $0xc] sm:$0x3] %vm1452, %v1450
    %1460 = vst.msk [vmem:[#allocation11 + $0xe] sm:$0x3] %vm1452, %v1451
    // Predicated region
    $region38: #{tpu_custom_call.1} parent=1 // pred_check
      _
    $region39: #{tpu_custom_call.1} parent=1 // pred_check_branch
      %1462 = sbr.rel (0) target = $region41
    $region40: #{tpu_custom_call.1} parent=1 // pred_region
      %s1464 = ssub.s32 256, 256
      %1465 = vsyncadd [#allocation5], %s1464
      %s1466 = sshll.u32 [#allocation11], 4
      %s1467 = int_to_ptr.vmem [resolvable:$true] %s1466
      %1472 = dma.vmem_to_hbm [thread:$0]  %s1467, 256, %s5, [#allocation5], 32, 32, 2
    $region41: #{tpu_custom_call.1} parent=1 // pred_fallthru
      _
    // Predicated region
    $region42: #{tpu_custom_call.1} parent=1 // pred_check
      _
    $region43: #{tpu_custom_call.1} parent=1 // pred_check_branch
      %1474 = sbr.rel (0) target = $region45
    $region44: #{tpu_custom_call.1} parent=1 // pred_region
      %1475 = dma.done [#allocation5], 256
    $region45: #{tpu_custom_call.1} parent=1 // pred_fallthru
      _
    %1476 = vsyncpa [#allocation4], 1
    %1477 = vsyncpa [#allocation7], 1
    %1478 = vsyncpa [#allocation10], 1
    %1479 = vsyncpa [#allocation5], 1

</llo_original>
